<compile_context>
chip_gen: v6e
topology: v6e:2x2x1
jax: 0.10.0
libtpu: 0.0.40
codegen_flags: <defaults>
</compile_context>

<pallas_src>
import functools

import numpy as np
import jax
import jax.numpy as jnp
from jax import lax
from jax.experimental import pallas as pl
from jax.experimental.pallas import tpu as pltpu

DT = 3600.0
CHUNK = 128     # Euler steps per chunk (lane-dense, multiple of 128)
GROUP = 8       # chunks per grid iteration (amortizes per-step pipeline overhead)

# deterministic physical parameters from the original script
Cwe = 21567.368048437285
Cwi = 188064.81655062342
Re = 1.4999822619982095
Rg = 3.9933826145529263
Ri = 0.5508908657108191
Rw = 5.645647560911718
Cz = 6953.942209294729
PARAMS = [Cz, Cwe, Cwi, Re, Ri, Rw, Rg]  # (Cai, Cwe, Cwi, Re, Ri, Rw, Rg)


def get_ABCD(Cai, Cwe, Cwi, Re, Ri, Rw, Rg):
    """Constant state-space matrices (float64 numpy; folded into the kernel)."""
    A = np.zeros((3, 3), np.float64)
    B = np.zeros((3, 5), np.float64)
    C = np.zeros((1, 3), np.float64)
    A[0, 0] = -1.0 / Cai * (1.0 / Rg + 1.0 / Ri)
    A[0, 2] = 1.0 / (Cai * Ri)
    A[1, 1] = -1.0 / Cwe * (1.0 / Re + 1.0 / Rw)
    A[1, 2] = 1.0 / (Cwe * Rw)
    A[2, 0] = 1.0 / (Cwi * Ri)
    A[2, 1] = 1.0 / (Cwi * Rw)
    A[2, 2] = -1.0 / Cwi * (1.0 / Rw + 1.0 / Ri)
    B[0, 0] = 1.0 / (Cai * Rg)
    B[0, 1] = 1.0 / Cai
    B[0, 2] = 1.0 / Cai
    B[1, 0] = 1.0 / (Cwe * Re)
    B[1, 3] = 1.0 / Cwe
    B[2, 4] = 1.0 / Cwi
    C[0, 0] = 1.0
    D = 0.0
    return A, B, C, D


@functools.lru_cache(maxsize=8)
def _build_operators_cached(a_key, b_key, dt, T):
    """Fold dt, A, B and the T-step Euler recurrence into constant operators.

    With M = I + dt*A and u_m = dt*B d_m:
        x_{s+j} = M^j x_s + sum_{m<j} M^{j-1-m} u_{s+m}
    Column ordering of the trajectory part is (j-1)*3 + a  (step-major,
    state-minor) so the kernel's flat store is already (step, state) layout.
    We's rows follow d's natural row-major flattening (row m*5 + b).
    """
    A = np.array(a_key, np.float64).reshape(3, 3)
    B = np.array(b_key, np.float64).reshape(3, 5)
    M = np.eye(3) + dt * A
    dtB = dt * B

    pows = np.empty((T + 1, 3, 3), np.float64)
    pows[0] = np.eye(3)
    for p in range(1, T + 1):
        pows[p] = pows[p - 1] @ M                      # M^p, f64 accumulation

    # Pe[k, (j-1)*3 + a] = (M^j)[a, k]
    Pe = np.zeros((128, 3 * T), np.float64)
    Pe[:3] = np.transpose(pows[1:T + 1], (2, 0, 1)).reshape(3, 3 * T)

    # MT[k, a] = (M^T)[a, k]  (row-vector form of the boundary transition)
    MT = np.zeros((128, 128), np.float64)
    MT[:3, :3] = pows[T].T

    # We: row m*5+b, traj col (j-1)*3+a = (M^{j-1-m} dtB)[a,b] for m <= j-1,
    #     boundary cols 3T+a          = (M^{T-1-m} dtB)[a,b]
    G_ = pows[:T] @ dtB                                # (T, 3, 5)  [p, a, b]
    jm1, mm = np.meshgrid(np.arange(T), np.arange(T), indexing="ij")
    valid = (jm1 - mm) >= 0
    Kt = G_[np.where(valid, jm1 - mm, 0)] * valid[:, :, None, None]   # [jm1, m, a, b]
    We_traj = np.transpose(Kt, (1, 3, 0, 2)).reshape(5 * T, 3 * T)    # row m*5+b
    We = np.zeros((5 * T, 3 * T + 128), np.float64)
    We[:, :3 * T] = We_traj
    We[:, 3 * T:3 * T + 3] = We_traj[:, (T - 1) * 3:(T - 1) * 3 + 3]

    return (jnp.asarray(Pe, jnp.float32),
            jnp.asarray(MT, jnp.float32),
            jnp.asarray(We, jnp.float32))


def _build_operators(A, B, dt, T):
    a_key = tuple(np.asarray(A, np.float64).reshape(-1).tolist())
    b_key = tuple(np.asarray(B, np.float64).reshape(-1).tolist())
    return _build_operators_cached(a_key, b_key, float(dt), int(T))


def simulator_kernel(x0_ref, d_ref, pe_ref, mt_ref, we_ref, out_ref,
                     carry_ref, xs_ref, f_ref, *, T, G):
    """One grid step = G chunks of T Euler steps each."""
    @pl.when(pl.program_id(0) == 0)
    def _():
        carry_ref[...] = x0_ref[...]                   # boundary state for chunk 0

    # Phase 1 (carry-independent): forcing contributions of all G chunks in one
    # batched MXU matmul (M = G rows instead of 1).
    d_blk = d_ref[...].reshape(G, 5 * T)
    f_ref[...] = jnp.dot(d_blk, we_ref[...], preferred_element_type=jnp.float32)

    # Phase 2 (serial): tiny boundary recurrence across the G chunks.  Only this
    # (1,128)x(128,128) dot + add sits on the serial critical chain.
    def body(g, xs):
        xs_ref[pl.ds(g, 1), :] = xs                    # state ENTERING chunk g
        f_b = f_ref[pl.ds(g, 1), 3 * T:]               # (1, 128) boundary forcing
        return jnp.dot(xs, mt_ref[...], preferred_element_type=jnp.float32) + f_b

    carry_ref[...] = lax.fori_loop(0, G, body, carry_ref[...], unroll=True)

    # Phase 3 (carry-independent): add the state-propagation term and emit the
    # whole (G, 3T) trajectory block as one unmasked lane-dense store.
    traj = (jnp.dot(xs_ref[...], pe_ref[...], preferred_element_type=jnp.float32)
            + f_ref[:, :3 * T])
    out_ref[...] = traj.reshape(1, G, 3 * T)


def simulate(x0, A, B, d, dt=DT, chunk=CHUNK, group=GROUP):
    """Pallas rollout.  Returns x_all of shape (N, 3), N = d.shape[0]."""
    n = int(d.shape[0])
    T, G = int(chunk), int(group)
    n_traj = max(n - 1, 1)                      # trajectory steps x_1 .. x_{n-1}
    C = -(-n_traj // T)                         # chunks
    CG = -(-C // G)                             # grid iterations
    n_pad = CG * G * T

    # zero-pad d to n_pad rows; natural row-major layout is already what We expects
    m = min(n, n_pad)
    d_pad = jnp.zeros((n_pad, 5), jnp.float32).at[:m].set(
        jnp.asarray(d[:m], jnp.float32))
    d_lane = d_pad.reshape(CG, G, 5 * T)        # NO transpose / relayout

    Pe, MT, We = _build_operators(A, B, dt, T)
    x0_pad = jnp.zeros((1, 128), jnp.float32).at[0, :3].set(
        jnp.asarray(x0, jnp.float32).reshape(3))

    kernel = functools.partial(simulator_kernel, T=T, G=G)
    out = pl.pallas_call(
        kernel,
        out_shape=jax.ShapeDtypeStruct((CG, G, 3 * T), jnp.float32),
        grid_spec=pltpu.PrefetchScalarGridSpec(
            num_scalar_prefetch=0,
            grid=(CG,),
            in_specs=[
                pl.BlockSpec((1, 128), lambda c: (0, 0)),              # x0 (resident)
                pl.BlockSpec((1, G, 5 * T), lambda c: (c, 0, 0)),      # d, streamed
                pl.BlockSpec((128, 3 * T), lambda c: (0, 0)),          # Pe (resident)
                pl.BlockSpec((128, 128), lambda c: (0, 0)),            # MT (resident)
                pl.BlockSpec((5 * T, 3 * T + 128), lambda c: (0, 0)),  # We (resident)
            ],
            out_specs=pl.BlockSpec((1, G, 3 * T), lambda c: (c, 0, 0)),
            scratch_shapes=[
                pltpu.VMEM((1, 128), jnp.float32),          # carried boundary state
                pltpu.VMEM((G, 128), jnp.float32),          # per-chunk boundary states
                pltpu.VMEM((G, 3 * T + 128), jnp.float32),  # forcing block F
            ],
        ),
        compiler_params=pltpu.CompilerParams(
            dimension_semantics=("arbitrary",),    # serial carry across grid steps
            vmem_limit_bytes=32 * 1024 * 1024,
        ),
    )(x0_pad, d_lane, Pe, MT, We)

    # (step, state)-interleaved output: a plain reshape recovers (n_pad, 3).
    traj = out.reshape(n_pad, 3)
    x0_row = jnp.asarray(x0, jnp.float32).reshape(1, 3)
    return jnp.concatenate([x0_row, traj], axis=0)[:n]


def simulate_ref(x0, A, B, d, dt=DT):
    """Pure-JAX sequential reference matching the PyTorch forward."""
    A32 = jnp.asarray(A, jnp.float32)
    B32 = jnp.asarray(B, jnp.float32)
    x = jnp.asarray(x0, jnp.float32).reshape(3)
    xs = [x]
    for i in range(d.shape[0] - 1):
        dx = A32 @ x + B32 @ d[i]
        x = x + dt * dx
        xs.append(x)
    return jnp.stack(xs, axis=0)


if __name__ == "__main__":
    # Small, deterministic problem: 8 time steps, 5 exogenous inputs, 3 states.
    n_steps = 8
    key = jax.random.PRNGKey(0)
    d = jax.random.normal(key, (n_steps, 5), dtype=jnp.float32)

    A, B, C, D = get_ABCD(*PARAMS)
    x0 = jnp.asarray([[20.0, 30.0, 26.0]], dtype=jnp.float32)  # (1, 3)

    x_all = jax.block_until_ready(simulate(x0, A, B, d, DT))
    x_ref = simulate_ref(x0, A, B, d, DT)

    assert x_all.shape == (n_steps, 3)
    assert jnp.allclose(x_all, x_ref, rtol=1e-4, atol=1e-3), (x_all, x_ref)
    print("KERNEL_OK")
</pallas_src>

<mosaic_0001>
module attributes {stable_mosaic.version = 11 : i64} {
  func.func @simulator_kernel(%arg0: i32, %arg1: memref<1x128xf32, #tpu.memory_space<vmem>>, %arg2: memref<1x8x640xf32, #tpu.memory_space<vmem>>, %arg3: memref<128x384xf32, #tpu.memory_space<vmem>>, %arg4: memref<128x128xf32, #tpu.memory_space<vmem>>, %arg5: memref<640x512xf32, #tpu.memory_space<vmem>>, %arg6: memref<1x8x384xf32, #tpu.memory_space<vmem>>, %arg7: memref<1x128xf32, #tpu.memory_space<vmem>>, %arg8: memref<8x128xf32, #tpu.memory_space<vmem>>, %arg9: memref<8x512xf32, #tpu.memory_space<vmem>>) attributes {dimension_semantics = [#tpu.dimension_semantics<arbitrary>], iteration_bounds = array<i64: 1>, scalar_prefetch = 0 : i64, scratch_operands = 3 : i64, tpu.core_type = #tpu.core_type<tc>, window_params = [{pipeline_mode = #tpu.pipeline_mode<synchronous>, transform_indices = @transform_0, window_bounds = array<i64: 1, 128>}, {transform_indices = @transform_1, window_bounds = array<i64: 1, 8, 640>}, {pipeline_mode = #tpu.pipeline_mode<synchronous>, transform_indices = @transform_2, window_bounds = array<i64: 128, 384>}, {pipeline_mode = #tpu.pipeline_mode<synchronous>, transform_indices = @transform_3, window_bounds = array<i64: 128, 128>}, {pipeline_mode = #tpu.pipeline_mode<synchronous>, transform_indices = @transform_4, window_bounds = array<i64: 640, 512>}, {transform_indices = @transform_5, window_bounds = array<i64: 1, 8, 384>}]} {
    %c0_i32 = arith.constant 0 : i32
    %0 = arith.cmpi eq, %arg0, %c0_i32 : i32
    %1 = arith.extui %0 : i1 to i32
    %c0_i32_0 = arith.constant 0 : i32
    %2 = arith.cmpi ne, %1, %c0_i32_0 : i32
    scf.if %2 {
      %c0_61 = arith.constant 0 : index
      %c0_62 = arith.constant 0 : index
      %73 = vector.load %arg1[%c0_61, %c0_62] : memref<1x128xf32, #tpu.memory_space<vmem>>, vector<1x128xf32>
      %c0_63 = arith.constant 0 : index
      %c0_64 = arith.constant 0 : index
      %74 = vector.load %arg7[%c0_63, %c0_64] : memref<1x128xf32, #tpu.memory_space<vmem>>, vector<1x128xf32>
      tpu.vector_store %arg7[%c0_63, %c0_64], %73 {strides = array<i32>} : memref<1x128xf32, #tpu.memory_space<vmem>>, vector<1x128xf32>,
    } else {
    }
    %c0 = arith.constant 0 : index
    %c0_1 = arith.constant 0 : index
    %c0_2 = arith.constant 0 : index
    %3 = vector.load %arg2[%c0, %c0_1, %c0_2] : memref<1x8x640xf32, #tpu.memory_space<vmem>>, vector<1x8x640xf32>
    %4 = vector.shape_cast %3 : vector<1x8x640xf32> to vector<8x640xf32>
    %c0_3 = arith.constant 0 : index
    %c0_4 = arith.constant 0 : index
    %5 = vector.load %arg5[%c0_3, %c0_4] : memref<640x512xf32, #tpu.memory_space<vmem>>, vector<640x512xf32>
    %cst = arith.constant dense<0.000000e+00> : vector<8x512xf32>
    %6 = tpu.matmul %4, %5, %cst {dimension_numbers = #tpu.dot_dimension_numbers<[1], [0], [0], [1], [0, 0, 1, 1], [], []>} : vector<8x640xf32>, vector<640x512xf32>, vector<8x512xf32> -> vector<8x512xf32>
    %c0_5 = arith.constant 0 : index
    %c0_6 = arith.constant 0 : index
    %7 = vector.load %arg9[%c0_5, %c0_6] : memref<8x512xf32, #tpu.memory_space<vmem>>, vector<8x512xf32>
    tpu.vector_store %arg9[%c0_5, %c0_6], %6 {strides = array<i32>} : memref<8x512xf32, #tpu.memory_space<vmem>>, vector<8x512xf32>,
    %c0_7 = arith.constant 0 : index
    %c0_8 = arith.constant 0 : index
    %8 = vector.load %arg7[%c0_7, %c0_8] : memref<1x128xf32, #tpu.memory_space<vmem>>, vector<1x128xf32>
    %c0_i32_9 = arith.constant 0 : i32
    %9 = arith.index_cast %c0_i32_9 : i32 to index
    %c0_10 = arith.constant 0 : index
    %10 = vector.load %arg8[%9, %c0_10] : memref<8x128xf32, #tpu.memory_space<vmem>>, vector<1x128xf32>
    tpu.vector_store %arg8[%9, %c0_10], %8 {strides = array<i32>} : memref<8x128xf32, #tpu.memory_space<vmem>>, vector<1x128xf32>,
    %11 = arith.index_cast %c0_i32_9 : i32 to index
    %c384 = arith.constant 384 : index
    %12 = vector.load %arg9[%11, %c384] : memref<8x512xf32, #tpu.memory_space<vmem>>, vector<1x128xf32>
    %c0_11 = arith.constant 0 : index
    %c0_12 = arith.constant 0 : index
    %13 = vector.load %arg4[%c0_11, %c0_12] : memref<128x128xf32, #tpu.memory_space<vmem>>, vector<128x128xf32>
    %cst_13 = arith.constant dense<0.000000e+00> : vector<1x128xf32>
    %14 = tpu.matmul %8, %13, %cst_13 {dimension_numbers = #tpu.dot_dimension_numbers<[1], [0], [0], [1], [0, 0, 1, 1], [], []>} : vector<1x128xf32>, vector<128x128xf32>, vector<1x128xf32> -> vector<1x128xf32>
    %15 = arith.addf %14, %12 : vector<1x128xf32>
    %c1_i32 = arith.constant 1 : i32
    %16 = arith.index_cast %c1_i32 : i32 to index
    %c0_14 = arith.constant 0 : index
    %17 = vector.load %arg8[%16, %c0_14] : memref<8x128xf32, #tpu.memory_space<vmem>>, vector<1x128xf32>
    tpu.vector_store %arg8[%16, %c0_14], %15 {strides = array<i32>} : memref<8x128xf32, #tpu.memory_space<vmem>>, vector<1x128xf32>,
    %18 = arith.index_cast %c1_i32 : i32 to index
    %c384_15 = arith.constant 384 : index
    %19 = vector.load %arg9[%18, %c384_15] : memref<8x512xf32, #tpu.memory_space<vmem>>, vector<1x128xf32>
    %c0_16 = arith.constant 0 : index
    %c0_17 = arith.constant 0 : index
    %20 = vector.load %arg4[%c0_16, %c0_17] : memref<128x128xf32, #tpu.memory_space<vmem>>, vector<128x128xf32>
    %cst_18 = arith.constant dense<0.000000e+00> : vector<1x128xf32>
    %21 = tpu.matmul %15, %20, %cst_18 {dimension_numbers = #tpu.dot_dimension_numbers<[1], [0], [0], [1], [0, 0, 1, 1], [], []>} : vector<1x128xf32>, vector<128x128xf32>, vector<1x128xf32> -> vector<1x128xf32>
    %22 = arith.addf %21, %19 : vector<1x128xf32>
    %c2_i32 = arith.constant 2 : i32
    %23 = arith.index_cast %c2_i32 : i32 to index
    %c0_19 = arith.constant 0 : index
    %24 = vector.load %arg8[%23, %c0_19] : memref<8x128xf32, #tpu.memory_space<vmem>>, vector<1x128xf32>
    tpu.vector_store %arg8[%23, %c0_19], %22 {strides = array<i32>} : memref<8x128xf32, #tpu.memory_space<vmem>>, vector<1x128xf32>,
    %25 = arith.index_cast %c2_i32 : i32 to index
    %c384_20 = arith.constant 384 : index
    %26 = vector.load %arg9[%25, %c384_20] : memref<8x512xf32, #tpu.memory_space<vmem>>, vector<1x128xf32>
    %c0_21 = arith.constant 0 : index
    %c0_22 = arith.constant 0 : index
    %27 = vector.load %arg4[%c0_21, %c0_22] : memref<128x128xf32, #tpu.memory_space<vmem>>, vector<128x128xf32>
    %cst_23 = arith.constant dense<0.000000e+00> : vector<1x128xf32>
    %28 = tpu.matmul %22, %27, %cst_23 {dimension_numbers = #tpu.dot_dimension_numbers<[1], [0], [0], [1], [0, 0, 1, 1], [], []>} : vector<1x128xf32>, vector<128x128xf32>, vector<1x128xf32> -> vector<1x128xf32>
    %29 = arith.addf %28, %26 : vector<1x128xf32>
    %c3_i32 = arith.constant 3 : i32
    %30 = arith.index_cast %c3_i32 : i32 to index
    %c0_24 = arith.constant 0 : index
    %31 = vector.load %arg8[%30, %c0_24] : memref<8x128xf32, #tpu.memory_space<vmem>>, vector<1x128xf32>
    tpu.vector_store %arg8[%30, %c0_24], %29 {strides = array<i32>} : memref<8x128xf32, #tpu.memory_space<vmem>>, vector<1x128xf32>,
    %32 = arith.index_cast %c3_i32 : i32 to index
    %c384_25 = arith.constant 384 : index
    %33 = vector.load %arg9[%32, %c384_25] : memref<8x512xf32, #tpu.memory_space<vmem>>, vector<1x128xf32>
    %c0_26 = arith.constant 0 : index
    %c0_27 = arith.constant 0 : index
    %34 = vector.load %arg4[%c0_26, %c0_27] : memref<128x128xf32, #tpu.memory_space<vmem>>, vector<128x128xf32>
    %cst_28 = arith.constant dense<0.000000e+00> : vector<1x128xf32>
    %35 = tpu.matmul %29, %34, %cst_28 {dimension_numbers = #tpu.dot_dimension_numbers<[1], [0], [0], [1], [0, 0, 1, 1], [], []>} : vector<1x128xf32>, vector<128x128xf32>, vector<1x128xf32> -> vector<1x128xf32>
    %36 = arith.addf %35, %33 : vector<1x128xf32>
    %c4_i32 = arith.constant 4 : i32
    %37 = arith.index_cast %c4_i32 : i32 to index
    %c0_29 = arith.constant 0 : index
    %38 = vector.load %arg8[%37, %c0_29] : memref<8x128xf32, #tpu.memory_space<vmem>>, vector<1x128xf32>
    tpu.vector_store %arg8[%37, %c0_29], %36 {strides = array<i32>} : memref<8x128xf32, #tpu.memory_space<vmem>>, vector<1x128xf32>,
    %39 = arith.index_cast %c4_i32 : i32 to index
    %c384_30 = arith.constant 384 : index
    %40 = vector.load %arg9[%39, %c384_30] : memref<8x512xf32, #tpu.memory_space<vmem>>, vector<1x128xf32>
    %c0_31 = arith.constant 0 : index
    %c0_32 = arith.constant 0 : index
    %41 = vector.load %arg4[%c0_31, %c0_32] : memref<128x128xf32, #tpu.memory_space<vmem>>, vector<128x128xf32>
    %cst_33 = arith.constant dense<0.000000e+00> : vector<1x128xf32>
    %42 = tpu.matmul %36, %41, %cst_33 {dimension_numbers = #tpu.dot_dimension_numbers<[1], [0], [0], [1], [0, 0, 1, 1], [], []>} : vector<1x128xf32>, vector<128x128xf32>, vector<1x128xf32> -> vector<1x128xf32>
    %43 = arith.addf %42, %40 : vector<1x128xf32>
    %c5_i32 = arith.constant 5 : i32
    %44 = arith.index_cast %c5_i32 : i32 to index
    %c0_34 = arith.constant 0 : index
    %45 = vector.load %arg8[%44, %c0_34] : memref<8x128xf32, #tpu.memory_space<vmem>>, vector<1x128xf32>
    tpu.vector_store %arg8[%44, %c0_34], %43 {strides = array<i32>} : memref<8x128xf32, #tpu.memory_space<vmem>>, vector<1x128xf32>,
    %46 = arith.index_cast %c5_i32 : i32 to index
    %c384_35 = arith.constant 384 : index
    %47 = vector.load %arg9[%46, %c384_35] : memref<8x512xf32, #tpu.memory_space<vmem>>, vector<1x128xf32>
    %c0_36 = arith.constant 0 : index
    %c0_37 = arith.constant 0 : index
    %48 = vector.load %arg4[%c0_36, %c0_37] : memref<128x128xf32, #tpu.memory_space<vmem>>, vector<128x128xf32>
    %cst_38 = arith.constant dense<0.000000e+00> : vector<1x128xf32>
    %49 = tpu.matmul %43, %48, %cst_38 {dimension_numbers = #tpu.dot_dimension_numbers<[1], [0], [0], [1], [0, 0, 1, 1], [], []>} : vector<1x128xf32>, vector<128x128xf32>, vector<1x128xf32> -> vector<1x128xf32>
    %50 = arith.addf %49, %47 : vector<1x128xf32>
    %c6_i32 = arith.constant 6 : i32
    %51 = arith.index_cast %c6_i32 : i32 to index
    %c0_39 = arith.constant 0 : index
    %52 = vector.load %arg8[%51, %c0_39] : memref<8x128xf32, #tpu.memory_space<vmem>>, vector<1x128xf32>
    tpu.vector_store %arg8[%51, %c0_39], %50 {strides = array<i32>} : memref<8x128xf32, #tpu.memory_space<vmem>>, vector<1x128xf32>,
    %53 = arith.index_cast %c6_i32 : i32 to index
    %c384_40 = arith.constant 384 : index
    %54 = vector.load %arg9[%53, %c384_40] : memref<8x512xf32, #tpu.memory_space<vmem>>, vector<1x128xf32>
    %c0_41 = arith.constant 0 : index
    %c0_42 = arith.constant 0 : index
    %55 = vector.load %arg4[%c0_41, %c0_42] : memref<128x128xf32, #tpu.memory_space<vmem>>, vector<128x128xf32>
    %cst_43 = arith.constant dense<0.000000e+00> : vector<1x128xf32>
    %56 = tpu.matmul %50, %55, %cst_43 {dimension_numbers = #tpu.dot_dimension_numbers<[1], [0], [0], [1], [0, 0, 1, 1], [], []>} : vector<1x128xf32>, vector<128x128xf32>, vector<1x128xf32> -> vector<1x128xf32>
    %57 = arith.addf %56, %54 : vector<1x128xf32>
    %c7_i32 = arith.constant 7 : i32
    %58 = arith.index_cast %c7_i32 : i32 to index
    %c0_44 = arith.constant 0 : index
    %59 = vector.load %arg8[%58, %c0_44] : memref<8x128xf32, #tpu.memory_space<vmem>>, vector<1x128xf32>
    tpu.vector_store %arg8[%58, %c0_44], %57 {strides = array<i32>} : memref<8x128xf32, #tpu.memory_space<vmem>>, vector<1x128xf32>,
    %60 = arith.index_cast %c7_i32 : i32 to index
    %c384_45 = arith.constant 384 : index
    %61 = vector.load %arg9[%60, %c384_45] : memref<8x512xf32, #tpu.memory_space<vmem>>, vector<1x128xf32>
    %c0_46 = arith.constant 0 : index
    %c0_47 = arith.constant 0 : index
    %62 = vector.load %arg4[%c0_46, %c0_47] : memref<128x128xf32, #tpu.memory_space<vmem>>, vector<128x128xf32>
    %cst_48 = arith.constant dense<0.000000e+00> : vector<1x128xf32>
    %63 = tpu.matmul %57, %62, %cst_48 {dimension_numbers = #tpu.dot_dimension_numbers<[1], [0], [0], [1], [0, 0, 1, 1], [], []>} : vector<1x128xf32>, vector<128x128xf32>, vector<1x128xf32> -> vector<1x128xf32>
    %64 = arith.addf %63, %61 : vector<1x128xf32>
    %c8_i32 = arith.constant 8 : i32
    %c0_49 = arith.constant 0 : index
    %c0_50 = arith.constant 0 : index
    %65 = vector.load %arg7[%c0_49, %c0_50] : memref<1x128xf32, #tpu.memory_space<vmem>>, vector<1x128xf32>
    tpu.vector_store %arg7[%c0_49, %c0_50], %64 {strides = array<i32>} : memref<1x128xf32, #tpu.memory_space<vmem>>, vector<1x128xf32>,
    %c0_51 = arith.constant 0 : index
    %c0_52 = arith.constant 0 : index
    %66 = vector.load %arg8[%c0_51, %c0_52] : memref<8x128xf32, #tpu.memory_space<vmem>>, vector<8x128xf32>
    %c0_53 = arith.constant 0 : index
    %c0_54 = arith.constant 0 : index
    %67 = vector.load %arg3[%c0_53, %c0_54] : memref<128x384xf32, #tpu.memory_space<vmem>>, vector<128x384xf32>
    %cst_55 = arith.constant dense<0.000000e+00> : vector<8x384xf32>
    %68 = tpu.matmul %66, %67, %cst_55 {dimension_numbers = #tpu.dot_dimension_numbers<[1], [0], [0], [1], [0, 0, 1, 1], [], []>} : vector<8x128xf32>, vector<128x384xf32>, vector<8x384xf32> -> vector<8x384xf32>
    %c0_56 = arith.constant 0 : index
    %c0_57 = arith.constant 0 : index
    %69 = vector.load %arg9[%c0_56, %c0_57] : memref<8x512xf32, #tpu.memory_space<vmem>>, vector<8x384xf32>
    %70 = arith.addf %68, %69 : vector<8x384xf32>
    %71 = vector.shape_cast %70 : vector<8x384xf32> to vector<1x8x384xf32>
    %c0_58 = arith.constant 0 : index
    %c0_59 = arith.constant 0 : index
    %c0_60 = arith.constant 0 : index
    %72 = vector.load %arg6[%c0_58, %c0_59, %c0_60] : memref<1x8x384xf32, #tpu.memory_space<vmem>>, vector<1x8x384xf32>
    tpu.vector_store %arg6[%c0_58, %c0_59, %c0_60], %71 {strides = array<i32>} : memref<1x8x384xf32, #tpu.memory_space<vmem>>, vector<1x8x384xf32>,
    return
  }
  func.func @transform_0(%arg0: i32) -> (i32, i32) {
    %c0_i32 = arith.constant 0 : i32
    %c0_i32_0 = arith.constant 0 : i32
    %c0_i32_1 = arith.constant 0 : i32
    return %c0_i32, %c0_i32_0 : i32, i32
  }
  func.func @transform_1(%arg0: i32) -> (i32, i32, i32) {
    %c0_i32 = arith.constant 0 : i32
    %c0_i32_0 = arith.constant 0 : i32
    %c0_i32_1 = arith.constant 0 : i32
    return %arg0, %c0_i32, %c0_i32_0 : i32, i32, i32
  }
  func.func @transform_2(%arg0: i32) -> (i32, i32) {
    %c0_i32 = arith.constant 0 : i32
    %c0_i32_0 = arith.constant 0 : i32
    %c0_i32_1 = arith.constant 0 : i32
    return %c0_i32, %c0_i32_0 : i32, i32
  }
  func.func @transform_3(%arg0: i32) -> (i32, i32) {
    %c0_i32 = arith.constant 0 : i32
    %c0_i32_0 = arith.constant 0 : i32
    %c0_i32_1 = arith.constant 0 : i32
    return %c0_i32, %c0_i32_0 : i32, i32
  }
  func.func @transform_4(%arg0: i32) -> (i32, i32) {
    %c0_i32 = arith.constant 0 : i32
    %c0_i32_0 = arith.constant 0 : i32
    %c0_i32_1 = arith.constant 0 : i32
    return %c0_i32, %c0_i32_0 : i32, i32
  }
  func.func @transform_5(%arg0: i32) -> (i32, i32, i32) {
    %c0_i32 = arith.constant 0 : i32
    %c0_i32_0 = arith.constant 0 : i32
    %c0_i32_1 = arith.constant 0 : i32
    return %arg0, %c0_i32, %c0_i32_0 : i32, i32, i32
  }
}

</mosaic_0001>

<llo_original>
// kernel: tpu_custom_call.1
$region0: #{tpu_custom_call.1}
  #allocation0 [shape = 'u32[]', space=smem, size = 0x4, offset = 0x4, fixed_abs, tag = 'smem constant byte address 0x4 - core index']
  #allocation1 [shape = 'u32[144,128]{1,0:T(1,128)}', space=vmem, size = 0x12000, scoped, tag = 'internal scratch']
  #allocation2 [shape = 'f32[1,128]{1,0:T(1,128)}', space=vmem, size = 0x200, scoped, tag = 'scratch operand']
  #allocation3 [shape = 'f32[8,128]{1,0:T(8,128)}', space=vmem, size = 0x1000, scoped, tag = 'scratch operand']
  #allocation4 [shape = 'f32[8,512]{1,0:T(8,128)}', space=vmem, size = 0x4000, scoped, tag = 'scratch operand']
  %s0 = inlined_call_operand.hbm [shape: f32[1,128], index: 0, kind: input, shape index: {}]
  %s1 = inlined_call_operand.hbm [shape: f32[1,8,640], index: 1, kind: input, shape index: {}]
  %s2 = inlined_call_operand.hbm [shape: f32[128,384], index: 2, kind: input, shape index: {}]
  %s3 = inlined_call_operand.hbm [shape: f32[128,128], index: 3, kind: input, shape index: {}]
  %s4 = inlined_call_operand.hbm [shape: f32[640,512], index: 4, kind: input, shape index: {}]
  %s5 = inlined_call_operand.hbm [shape: f32[1,8,384], index: 5, kind: output, shape index: {}]
  %s6 = sld [smem:[#allocation0]]
  $region54: #{tpu_custom_call.1} parent=0
    _
  %s8 = ssub.s32 1, %s6
  %s9 = scalar_select 0, %s8, %s6
  $region1: #{tpu_custom_call.1} parent=0
    #allocation5 [shape = 'u8[512]{0}', space=vmem, size = 0x400, scoped, tag = 'input window, operand 0, single buffered']
    #allocation6 [shape = 's32[1]{0}', space=sflag, size = 0x4, scoped, tag = 'scoped memory for tpu_custom_call.1']
    #allocation7 [shape = 's32[1]{0}', space=sflag, size = 0x4, scoped, tag = 'scoped memory for tpu_custom_call.1']
    #allocation8 [shape = 'u8[20480]{0}', space=vmem, size = 0x5000, scoped, tag = 'input window, operand 1, single buffered']
    #allocation9 [shape = 's32[1]{0}', space=sflag, size = 0x4, scoped, tag = 'scoped memory for tpu_custom_call.1']
    #allocation10 [shape = 'u8[196608]{0}', space=vmem, size = 0x30000, scoped, tag = 'input window, operand 2, single buffered']
    #allocation11 [shape = 'u8[65536]{0}', space=vmem, size = 0x10000, scoped, tag = 'input window, operand 3, single buffered']
    #allocation12 [shape = 's32[1]{0}', space=sflag, size = 0x4, scoped, tag = 'scoped memory for tpu_custom_call.1']
    #allocation13 [shape = 'u8[1310720]{0}', space=vmem, size = 0x140000, scoped, tag = 'input window, operand 4, single buffered']
    #allocation14 [shape = 'u8[12288]{0}', space=vmem, size = 0x3000, scoped, tag = 'output window, operand 0, single buffered']
    %10 = vsyncpa [#allocation6], 0
    %11 = vsyncpa [#allocation9], 0
    %12 = vsyncpa [#allocation12], 0
    %13 = vsyncpa [#allocation7], 0
    // Predicated region
    $region2: #{tpu_custom_call.1} parent=1 // pred_check
      _
    $region3: #{tpu_custom_call.1} parent=1 // pred_check_branch
      %15 = sbr.rel (0) target = $region5
    $region4: #{tpu_custom_call.1} parent=1 // pred_region
      %s17 = ssub.s32 16, 16
      %18 = vsyncadd [#allocation6], %s17
      %s20 = sshll.u32 [#allocation5], 4
      %s21 = int_to_ptr.vmem [resolvable:$true] %s20
      %23 = dma.hbm_to_vmem [thread:$0]  %s0, 16, %s21, [#allocation6]
    $region5: #{tpu_custom_call.1} parent=1 // pred_fallthru
      _
    // Predicated region
    $region6: #{tpu_custom_call.1} parent=1 // pred_check
      _
    $region7: #{tpu_custom_call.1} parent=1 // pred_check_branch
      %25 = sbr.rel (0) target = $region9
    $region8: #{tpu_custom_call.1} parent=1 // pred_region
      %s27 = ssub.s32 640, 640
      %28 = vsyncadd [#allocation9], %s27
      %s30 = sshll.u32 [#allocation8], 4
      %s31 = int_to_ptr.vmem [resolvable:$true] %s30
      %33 = dma.hbm_to_vmem [thread:$0]  %s1, 640, %s31, [#allocation9]
    $region9: #{tpu_custom_call.1} parent=1 // pred_fallthru
      _
    // Predicated region
    $region10: #{tpu_custom_call.1} parent=1 // pred_check
      _
    $region11: #{tpu_custom_call.1} parent=1 // pred_check_branch
      %35 = sbr.rel (0) target = $region13
    $region12: #{tpu_custom_call.1} parent=1 // pred_region
      %s37 = ssub.s32 6144, 6144
      %38 = vsyncadd [#allocation9], %s37
      %s39 = sshll.u32 [#allocation10], 4
      %s40 = int_to_ptr.vmem [resolvable:$true] %s39
      %45 = dma.hbm_to_vmem [thread:$0]  %s2, 6144, %s40, [#allocation9], 384, 384, 24
    $region13: #{tpu_custom_call.1} parent=1 // pred_fallthru
      _
    // Predicated region
    $region14: #{tpu_custom_call.1} parent=1 // pred_check
      _
    $region15: #{tpu_custom_call.1} parent=1 // pred_check_branch
      %47 = sbr.rel (0) target = $region17
    $region16: #{tpu_custom_call.1} parent=1 // pred_region
      %s49 = ssub.s32 2048, 2048
      %50 = vsyncadd [#allocation12], %s49
      %s51 = sshll.u32 [#allocation11], 4
      %s52 = int_to_ptr.vmem [resolvable:$true] %s51
      %57 = dma.hbm_to_vmem [thread:$0]  %s3, 2048, %s52, [#allocation12], 128, 128, 8
    $region17: #{tpu_custom_call.1} parent=1 // pred_fallthru
      _
    // Predicated region
    $region18: #{tpu_custom_call.1} parent=1 // pred_check
      _
    $region19: #{tpu_custom_call.1} parent=1 // pred_check_branch
      %59 = sbr.rel (0) target = $region21
    $region20: #{tpu_custom_call.1} parent=1 // pred_region
      %s61 = ssub.s32 40960, 40960
      %62 = vsyncadd [#allocation12], %s61
      %s63 = sshll.u32 [#allocation13], 4
      %s64 = int_to_ptr.vmem [resolvable:$true] %s63
      %69 = dma.hbm_to_vmem [thread:$0]  %s4, 40960, %s64, [#allocation12], 512, 512, 32
    $region21: #{tpu_custom_call.1} parent=1 // pred_fallthru
      _
    // Predicated region
    $region22: #{tpu_custom_call.1} parent=1 // pred_check
      _
    $region23: #{tpu_custom_call.1} parent=1 // pred_check_branch
      %71 = sbr.rel (0) target = $region25
    $region24: #{tpu_custom_call.1} parent=1 // pred_region
      %72 = dma.done [#allocation6], 16
    $region25: #{tpu_custom_call.1} parent=1 // pred_fallthru
      _
    // Predicated region
    $region26: #{tpu_custom_call.1} parent=1 // pred_check
      _
    $region27: #{tpu_custom_call.1} parent=1 // pred_check_branch
      %74 = sbr.rel (0) target = $region29
    $region28: #{tpu_custom_call.1} parent=1 // pred_region
      %75 = dma.done [#allocation9], 640
    $region29: #{tpu_custom_call.1} parent=1 // pred_fallthru
      _
    // Predicated region
    $region30: #{tpu_custom_call.1} parent=1 // pred_check
      _
    $region31: #{tpu_custom_call.1} parent=1 // pred_check_branch
      %77 = sbr.rel (0) target = $region33
    $region32: #{tpu_custom_call.1} parent=1 // pred_region
      %78 = dma.done [#allocation9], 6144
    $region33: #{tpu_custom_call.1} parent=1 // pred_fallthru
      _
    // Predicated region
    $region34: #{tpu_custom_call.1} parent=1 // pred_check
      _
    $region35: #{tpu_custom_call.1} parent=1 // pred_check_branch
      %80 = sbr.rel (0) target = $region37
    $region36: #{tpu_custom_call.1} parent=1 // pred_region
      %81 = dma.done [#allocation12], 2048
    $region37: #{tpu_custom_call.1} parent=1 // pred_fallthru
      _
    // Predicated region
    $region38: #{tpu_custom_call.1} parent=1 // pred_check
      _
    $region39: #{tpu_custom_call.1} parent=1 // pred_check_branch
      %83 = sbr.rel (0) target = $region41
    $region40: #{tpu_custom_call.1} parent=1 // pred_region
      %84 = dma.done [#allocation12], 40960
    $region41: #{tpu_custom_call.1} parent=1 // pred_fallthru
      _
    %p85 = scmp.eq.s32.totalorder 0, 0
    // Predicated region
    $region42: #{tpu_custom_call.1} parent=1 // pred_check
      %p86 = pneg %p85
    $region43: #{tpu_custom_call.1} parent=1 // pred_check_branch
      %88 = sbr.rel (%p86) target = $region45
    $region44: #{tpu_custom_call.1} parent=1 // pred_region
      %v89 = vld [vmem:[#allocation5] sm:$0x1]
      %90 = vst [vmem:[#allocation2] sm:$0x1] %v89
    $region45: #{tpu_custom_call.1} parent=1 // pred_fallthru
      _
    %v91 = vld [vmem:[#allocation8] sm:$0xff]
    %v92 = vld [vmem:[#allocation8 + $0x8] sm:$0xff]
    %v93 = vld [vmem:[#allocation8 + $0x10] sm:$0xff]
    %v94 = vld [vmem:[#allocation8 + $0x18] sm:$0xff]
    %v95 = vld [vmem:[#allocation8 + $0x20] sm:$0xff]
    %v96 = vld [vmem:[#allocation13] sm:$0xff]
    %v97 = vld [vmem:[#allocation13 + $0x8] sm:$0xff]
    %v98 = vld [vmem:[#allocation13 + $0x10] sm:$0xff]
    %v99 = vld [vmem:[#allocation13 + $0x18] sm:$0xff]
    %v100 = vld [vmem:[#allocation13 + $0x20] sm:$0xff]
    %v101 = vld [vmem:[#allocation13 + $0x28] sm:$0xff]
    %v102 = vld [vmem:[#allocation13 + $0x30] sm:$0xff]
    %v103 = vld [vmem:[#allocation13 + $0x38] sm:$0xff]
    %v104 = vld [vmem:[#allocation13 + $0x40] sm:$0xff]
    %v105 = vld [vmem:[#allocation13 + $0x48] sm:$0xff]
    %v106 = vld [vmem:[#allocation13 + $0x50] sm:$0xff]
    %v107 = vld [vmem:[#allocation13 + $0x58] sm:$0xff]
    %v108 = vld [vmem:[#allocation13 + $0x60] sm:$0xff]
    %v109 = vld [vmem:[#allocation13 + $0x68] sm:$0xff]
    %v110 = vld [vmem:[#allocation13 + $0x70] sm:$0xff]
    %v111 = vld [vmem:[#allocation13 + $0x78] sm:$0xff]
    %v112 = vld [vmem:[#allocation13 + $0x80] sm:$0xff]
    %v113 = vld [vmem:[#allocation13 + $0x88] sm:$0xff]
    %v114 = vld [vmem:[#allocation13 + $0x90] sm:$0xff]
    %v115 = vld [vmem:[#allocation13 + $0x98] sm:$0xff]
    %v116 = vld [vmem:[#allocation13 + $0xa0] sm:$0xff]
    %v117 = vld [vmem:[#allocation13 + $0xa8] sm:$0xff]
    %v118 = vld [vmem:[#allocation13 + $0xb0] sm:$0xff]
    %v119 = vld [vmem:[#allocation13 + $0xb8] sm:$0xff]
    %v120 = vld [vmem:[#allocation13 + $0xc0] sm:$0xff]
    %v121 = vld [vmem:[#allocation13 + $0xc8] sm:$0xff]
    %v122 = vld [vmem:[#allocation13 + $0xd0] sm:$0xff]
    %v123 = vld [vmem:[#allocation13 + $0xd8] sm:$0xff]
    %v124 = vld [vmem:[#allocation13 + $0xe0] sm:$0xff]
    %v125 = vld [vmem:[#allocation13 + $0xe8] sm:$0xff]
    %v126 = vld [vmem:[#allocation13 + $0xf0] sm:$0xff]
    %v127 = vld [vmem:[#allocation13 + $0xf8] sm:$0xff]
    %v128 = vld [vmem:[#allocation13 + $0x100] sm:$0xff]
    %v129 = vld [vmem:[#allocation13 + $0x108] sm:$0xff]
    %v130 = vld [vmem:[#allocation13 + $0x110] sm:$0xff]
    %v131 = vld [vmem:[#allocation13 + $0x118] sm:$0xff]
    %v132 = vld [vmem:[#allocation13 + $0x120] sm:$0xff]
    %v133 = vld [vmem:[#allocation13 + $0x128] sm:$0xff]
    %v134 = vld [vmem:[#allocation13 + $0x130] sm:$0xff]
    %v135 = vld [vmem:[#allocation13 + $0x138] sm:$0xff]
    %v136 = vld [vmem:[#allocation13 + $0x140] sm:$0xff]
    %v137 = vld [vmem:[#allocation13 + $0x148] sm:$0xff]
    %v138 = vld [vmem:[#allocation13 + $0x150] sm:$0xff]
    %v139 = vld [vmem:[#allocation13 + $0x158] sm:$0xff]
    %v140 = vld [vmem:[#allocation13 + $0x160] sm:$0xff]
    %v141 = vld [vmem:[#allocation13 + $0x168] sm:$0xff]
    %v142 = vld [vmem:[#allocation13 + $0x170] sm:$0xff]
    %v143 = vld [vmem:[#allocation13 + $0x178] sm:$0xff]
    %v144 = vld [vmem:[#allocation13 + $0x180] sm:$0xff]
    %v145 = vld [vmem:[#allocation13 + $0x188] sm:$0xff]
    %v146 = vld [vmem:[#allocation13 + $0x190] sm:$0xff]
    %v147 = vld [vmem:[#allocation13 + $0x198] sm:$0xff]
    %v148 = vld [vmem:[#allocation13 + $0x1a0] sm:$0xff]
    %v149 = vld [vmem:[#allocation13 + $0x1a8] sm:$0xff]
    %v150 = vld [vmem:[#allocation13 + $0x1b0] sm:$0xff]
    %v151 = vld [vmem:[#allocation13 + $0x1b8] sm:$0xff]
    %v152 = vld [vmem:[#allocation13 + $0x1c0] sm:$0xff]
    %v153 = vld [vmem:[#allocation13 + $0x1c8] sm:$0xff]
    %v154 = vld [vmem:[#allocation13 + $0x1d0] sm:$0xff]
    %v155 = vld [vmem:[#allocation13 + $0x1d8] sm:$0xff]
    %v156 = vld [vmem:[#allocation13 + $0x1e0] sm:$0xff]
    %v157 = vld [vmem:[#allocation13 + $0x1e8] sm:$0xff]
    %v158 = vld [vmem:[#allocation13 + $0x1f0] sm:$0xff]
    %v159 = vld [vmem:[#allocation13 + $0x1f8] sm:$0xff]
    %v160 = vld [vmem:[#allocation13 + $0x200] sm:$0xff]
    %v161 = vld [vmem:[#allocation13 + $0x208] sm:$0xff]
    %v162 = vld [vmem:[#allocation13 + $0x210] sm:$0xff]
    %v163 = vld [vmem:[#allocation13 + $0x218] sm:$0xff]
    %v164 = vld [vmem:[#allocation13 + $0x220] sm:$0xff]
    %v165 = vld [vmem:[#allocation13 + $0x228] sm:$0xff]
    %v166 = vld [vmem:[#allocation13 + $0x230] sm:$0xff]
    %v167 = vld [vmem:[#allocation13 + $0x238] sm:$0xff]
    %v168 = vld [vmem:[#allocation13 + $0x240] sm:$0xff]
    %v169 = vld [vmem:[#allocation13 + $0x248] sm:$0xff]
    %v170 = vld [vmem:[#allocation13 + $0x250] sm:$0xff]
    %v171 = vld [vmem:[#allocation13 + $0x258] sm:$0xff]
    %v172 = vld [vmem:[#allocation13 + $0x260] sm:$0xff]
    %v173 = vld [vmem:[#allocation13 + $0x268] sm:$0xff]
    %v174 = vld [vmem:[#allocation13 + $0x270] sm:$0xff]
    %v175 = vld [vmem:[#allocation13 + $0x278] sm:$0xff]
    %v176 = vld [vmem:[#allocation13 + $0x280] sm:$0xff]
    %v177 = vld [vmem:[#allocation13 + $0x288] sm:$0xff]
    %v178 = vld [vmem:[#allocation13 + $0x290] sm:$0xff]
    %v179 = vld [vmem:[#allocation13 + $0x298] sm:$0xff]
    %v180 = vld [vmem:[#allocation13 + $0x2a0] sm:$0xff]
    %v181 = vld [vmem:[#allocation13 + $0x2a8] sm:$0xff]
    %v182 = vld [vmem:[#allocation13 + $0x2b0] sm:$0xff]
    %v183 = vld [vmem:[#allocation13 + $0x2b8] sm:$0xff]
    %v184 = vld [vmem:[#allocation13 + $0x2c0] sm:$0xff]
    %v185 = vld [vmem:[#allocation13 + $0x2c8] sm:$0xff]
    %v186 = vld [vmem:[#allocation13 + $0x2d0] sm:$0xff]
    %v187 = vld [vmem:[#allocation13 + $0x2d8] sm:$0xff]
    %v188 = vld [vmem:[#allocation13 + $0x2e0] sm:$0xff]
    %v189 = vld [vmem:[#allocation13 + $0x2e8] sm:$0xff]
    %v190 = vld [vmem:[#allocation13 + $0x2f0] sm:$0xff]
    %v191 = vld [vmem:[#allocation13 + $0x2f8] sm:$0xff]
    %v192 = vld [vmem:[#allocation13 + $0x300] sm:$0xff]
    %v193 = vld [vmem:[#allocation13 + $0x308] sm:$0xff]
    %v194 = vld [vmem:[#allocation13 + $0x310] sm:$0xff]
    %v195 = vld [vmem:[#allocation13 + $0x318] sm:$0xff]
    %v196 = vld [vmem:[#allocation13 + $0x320] sm:$0xff]
    %v197 = vld [vmem:[#allocation13 + $0x328] sm:$0xff]
    %v198 = vld [vmem:[#allocation13 + $0x330] sm:$0xff]
    %v199 = vld [vmem:[#allocation13 + $0x338] sm:$0xff]
    %v200 = vld [vmem:[#allocation13 + $0x340] sm:$0xff]
    %v201 = vld [vmem:[#allocation13 + $0x348] sm:$0xff]
    %v202 = vld [vmem:[#allocation13 + $0x350] sm:$0xff]
    %v203 = vld [vmem:[#allocation13 + $0x358] sm:$0xff]
    %v204 = vld [vmem:[#allocation13 + $0x360] sm:$0xff]
    %v205 = vld [vmem:[#allocation13 + $0x368] sm:$0xff]
    %v206 = vld [vmem:[#allocation13 + $0x370] sm:$0xff]
    %v207 = vld [vmem:[#allocation13 + $0x378] sm:$0xff]
    %v208 = vld [vmem:[#allocation13 + $0x380] sm:$0xff]
    %v209 = vld [vmem:[#allocation13 + $0x388] sm:$0xff]
    %v210 = vld [vmem:[#allocation13 + $0x390] sm:$0xff]
    %v211 = vld [vmem:[#allocation13 + $0x398] sm:$0xff]
    %v212 = vld [vmem:[#allocation13 + $0x3a0] sm:$0xff]
    %v213 = vld [vmem:[#allocation13 + $0x3a8] sm:$0xff]
    %v214 = vld [vmem:[#allocation13 + $0x3b0] sm:$0xff]
    %v215 = vld [vmem:[#allocation13 + $0x3b8] sm:$0xff]
    %v216 = vld [vmem:[#allocation13 + $0x3c0] sm:$0xff]
    %v217 = vld [vmem:[#allocation13 + $0x3c8] sm:$0xff]
    %v218 = vld [vmem:[#allocation13 + $0x3d0] sm:$0xff]
    %v219 = vld [vmem:[#allocation13 + $0x3d8] sm:$0xff]
    %v220 = vld [vmem:[#allocation13 + $0x3e0] sm:$0xff]
    %v221 = vld [vmem:[#allocation13 + $0x3e8] sm:$0xff]
    %v222 = vld [vmem:[#allocation13 + $0x3f0] sm:$0xff]
    %v223 = vld [vmem:[#allocation13 + $0x3f8] sm:$0xff]
    %v224 = vld [vmem:[#allocation13 + $0x400] sm:$0xff]
    %v225 = vld [vmem:[#allocation13 + $0x408] sm:$0xff]
    %v226 = vld [vmem:[#allocation13 + $0x410] sm:$0xff]
    %v227 = vld [vmem:[#allocation13 + $0x418] sm:$0xff]
    %v228 = vld [vmem:[#allocation13 + $0x420] sm:$0xff]
    %v229 = vld [vmem:[#allocation13 + $0x428] sm:$0xff]
    %v230 = vld [vmem:[#allocation13 + $0x430] sm:$0xff]
    %v231 = vld [vmem:[#allocation13 + $0x438] sm:$0xff]
    %v232 = vld [vmem:[#allocation13 + $0x440] sm:$0xff]
    %v233 = vld [vmem:[#allocation13 + $0x448] sm:$0xff]
    %v234 = vld [vmem:[#allocation13 + $0x450] sm:$0xff]
    %v235 = vld [vmem:[#allocation13 + $0x458] sm:$0xff]
    %v236 = vld [vmem:[#allocation13 + $0x460] sm:$0xff]
    %v237 = vld [vmem:[#allocation13 + $0x468] sm:$0xff]
    %v238 = vld [vmem:[#allocation13 + $0x470] sm:$0xff]
    %v239 = vld [vmem:[#allocation13 + $0x478] sm:$0xff]
    %v240 = vld [vmem:[#allocation13 + $0x480] sm:$0xff]
    %v241 = vld [vmem:[#allocation13 + $0x488] sm:$0xff]
    %v242 = vld [vmem:[#allocation13 + $0x490] sm:$0xff]
    %v243 = vld [vmem:[#allocation13 + $0x498] sm:$0xff]
    %v244 = vld [vmem:[#allocation13 + $0x4a0] sm:$0xff]
    %v245 = vld [vmem:[#allocation13 + $0x4a8] sm:$0xff]
    %v246 = vld [vmem:[#allocation13 + $0x4b0] sm:$0xff]
    %v247 = vld [vmem:[#allocation13 + $0x4b8] sm:$0xff]
    %v248 = vld [vmem:[#allocation13 + $0x4c0] sm:$0xff]
    %v249 = vld [vmem:[#allocation13 + $0x4c8] sm:$0xff]
    %v250 = vld [vmem:[#allocation13 + $0x4d0] sm:$0xff]
    %v251 = vld [vmem:[#allocation13 + $0x4d8] sm:$0xff]
    %v252 = vld [vmem:[#allocation13 + $0x4e0] sm:$0xff]
    %v253 = vld [vmem:[#allocation13 + $0x4e8] sm:$0xff]
    %v254 = vld [vmem:[#allocation13 + $0x4f0] sm:$0xff]
    %v255 = vld [vmem:[#allocation13 + $0x4f8] sm:$0xff]
    %v256 = vld [vmem:[#allocation13 + $0x500] sm:$0xff]
    %v257 = vld [vmem:[#allocation13 + $0x508] sm:$0xff]
    %v258 = vld [vmem:[#allocation13 + $0x510] sm:$0xff]
    %v259 = vld [vmem:[#allocation13 + $0x518] sm:$0xff]
    %v260 = vld [vmem:[#allocation13 + $0x520] sm:$0xff]
    %v261 = vld [vmem:[#allocation13 + $0x528] sm:$0xff]
    %v262 = vld [vmem:[#allocation13 + $0x530] sm:$0xff]
    %v263 = vld [vmem:[#allocation13 + $0x538] sm:$0xff]
    %v264 = vld [vmem:[#allocation13 + $0x540] sm:$0xff]
    %v265 = vld [vmem:[#allocation13 + $0x548] sm:$0xff]
    %v266 = vld [vmem:[#allocation13 + $0x550] sm:$0xff]
    %v267 = vld [vmem:[#allocation13 + $0x558] sm:$0xff]
    %v268 = vld [vmem:[#allocation13 + $0x560] sm:$0xff]
    %v269 = vld [vmem:[#allocation13 + $0x568] sm:$0xff]
    %v270 = vld [vmem:[#allocation13 + $0x570] sm:$0xff]
    %v271 = vld [vmem:[#allocation13 + $0x578] sm:$0xff]
    %v272 = vld [vmem:[#allocation13 + $0x580] sm:$0xff]
    %v273 = vld [vmem:[#allocation13 + $0x588] sm:$0xff]
    %v274 = vld [vmem:[#allocation13 + $0x590] sm:$0xff]
    %v275 = vld [vmem:[#allocation13 + $0x598] sm:$0xff]
    %v276 = vld [vmem:[#allocation13 + $0x5a0] sm:$0xff]
    %v277 = vld [vmem:[#allocation13 + $0x5a8] sm:$0xff]
    %v278 = vld [vmem:[#allocation13 + $0x5b0] sm:$0xff]
    %v279 = vld [vmem:[#allocation13 + $0x5b8] sm:$0xff]
    %v280 = vld [vmem:[#allocation13 + $0x5c0] sm:$0xff]
    %v281 = vld [vmem:[#allocation13 + $0x5c8] sm:$0xff]
    %v282 = vld [vmem:[#allocation13 + $0x5d0] sm:$0xff]
    %v283 = vld [vmem:[#allocation13 + $0x5d8] sm:$0xff]
    %v284 = vld [vmem:[#allocation13 + $0x5e0] sm:$0xff]
    %v285 = vld [vmem:[#allocation13 + $0x5e8] sm:$0xff]
    %v286 = vld [vmem:[#allocation13 + $0x5f0] sm:$0xff]
    %v287 = vld [vmem:[#allocation13 + $0x5f8] sm:$0xff]
    %v288 = vld [vmem:[#allocation13 + $0x600] sm:$0xff]
    %v289 = vld [vmem:[#allocation13 + $0x608] sm:$0xff]
    %v290 = vld [vmem:[#allocation13 + $0x610] sm:$0xff]
    %v291 = vld [vmem:[#allocation13 + $0x618] sm:$0xff]
    %v292 = vld [vmem:[#allocation13 + $0x620] sm:$0xff]
    %v293 = vld [vmem:[#allocation13 + $0x628] sm:$0xff]
    %v294 = vld [vmem:[#allocation13 + $0x630] sm:$0xff]
    %v295 = vld [vmem:[#allocation13 + $0x638] sm:$0xff]
    %v296 = vld [vmem:[#allocation13 + $0x640] sm:$0xff]
    %v297 = vld [vmem:[#allocation13 + $0x648] sm:$0xff]
    %v298 = vld [vmem:[#allocation13 + $0x650] sm:$0xff]
    %v299 = vld [vmem:[#allocation13 + $0x658] sm:$0xff]
    %v300 = vld [vmem:[#allocation13 + $0x660] sm:$0xff]
    %v301 = vld [vmem:[#allocation13 + $0x668] sm:$0xff]
    %v302 = vld [vmem:[#allocation13 + $0x670] sm:$0xff]
    %v303 = vld [vmem:[#allocation13 + $0x678] sm:$0xff]
    %v304 = vld [vmem:[#allocation13 + $0x680] sm:$0xff]
    %v305 = vld [vmem:[#allocation13 + $0x688] sm:$0xff]
    %v306 = vld [vmem:[#allocation13 + $0x690] sm:$0xff]
    %v307 = vld [vmem:[#allocation13 + $0x698] sm:$0xff]
    %v308 = vld [vmem:[#allocation13 + $0x6a0] sm:$0xff]
    %v309 = vld [vmem:[#allocation13 + $0x6a8] sm:$0xff]
    %v310 = vld [vmem:[#allocation13 + $0x6b0] sm:$0xff]
    %v311 = vld [vmem:[#allocation13 + $0x6b8] sm:$0xff]
    %v312 = vld [vmem:[#allocation13 + $0x6c0] sm:$0xff]
    %v313 = vld [vmem:[#allocation13 + $0x6c8] sm:$0xff]
    %v314 = vld [vmem:[#allocation13 + $0x6d0] sm:$0xff]
    %v315 = vld [vmem:[#allocation13 + $0x6d8] sm:$0xff]
    %v316 = vld [vmem:[#allocation13 + $0x6e0] sm:$0xff]
    %v317 = vld [vmem:[#allocation13 + $0x6e8] sm:$0xff]
    %v318 = vld [vmem:[#allocation13 + $0x6f0] sm:$0xff]
    %v319 = vld [vmem:[#allocation13 + $0x6f8] sm:$0xff]
    %v320 = vld [vmem:[#allocation13 + $0x700] sm:$0xff]
    %v321 = vld [vmem:[#allocation13 + $0x708] sm:$0xff]
    %v322 = vld [vmem:[#allocation13 + $0x710] sm:$0xff]
    %v323 = vld [vmem:[#allocation13 + $0x718] sm:$0xff]
    %v324 = vld [vmem:[#allocation13 + $0x720] sm:$0xff]
    %v325 = vld [vmem:[#allocation13 + $0x728] sm:$0xff]
    %v326 = vld [vmem:[#allocation13 + $0x730] sm:$0xff]
    %v327 = vld [vmem:[#allocation13 + $0x738] sm:$0xff]
    %v328 = vld [vmem:[#allocation13 + $0x740] sm:$0xff]
    %v329 = vld [vmem:[#allocation13 + $0x748] sm:$0xff]
    %v330 = vld [vmem:[#allocation13 + $0x750] sm:$0xff]
    %v331 = vld [vmem:[#allocation13 + $0x758] sm:$0xff]
    %v332 = vld [vmem:[#allocation13 + $0x760] sm:$0xff]
    %v333 = vld [vmem:[#allocation13 + $0x768] sm:$0xff]
    %v334 = vld [vmem:[#allocation13 + $0x770] sm:$0xff]
    %v335 = vld [vmem:[#allocation13 + $0x778] sm:$0xff]
    %v336 = vld [vmem:[#allocation13 + $0x780] sm:$0xff]
    %v337 = vld [vmem:[#allocation13 + $0x788] sm:$0xff]
    %v338 = vld [vmem:[#allocation13 + $0x790] sm:$0xff]
    %v339 = vld [vmem:[#allocation13 + $0x798] sm:$0xff]
    %v340 = vld [vmem:[#allocation13 + $0x7a0] sm:$0xff]
    %v341 = vld [vmem:[#allocation13 + $0x7a8] sm:$0xff]
    %v342 = vld [vmem:[#allocation13 + $0x7b0] sm:$0xff]
    %v343 = vld [vmem:[#allocation13 + $0x7b8] sm:$0xff]
    %v344 = vld [vmem:[#allocation13 + $0x7c0] sm:$0xff]
    %v345 = vld [vmem:[#allocation13 + $0x7c8] sm:$0xff]
    %v346 = vld [vmem:[#allocation13 + $0x7d0] sm:$0xff]
    %v347 = vld [vmem:[#allocation13 + $0x7d8] sm:$0xff]
    %v348 = vld [vmem:[#allocation13 + $0x7e0] sm:$0xff]
    %v349 = vld [vmem:[#allocation13 + $0x7e8] sm:$0xff]
    %v350 = vld [vmem:[#allocation13 + $0x7f0] sm:$0xff]
    %v351 = vld [vmem:[#allocation13 + $0x7f8] sm:$0xff]
    %v352 = vld [vmem:[#allocation13 + $0x800] sm:$0xff]
    %v353 = vld [vmem:[#allocation13 + $0x808] sm:$0xff]
    %v354 = vld [vmem:[#allocation13 + $0x810] sm:$0xff]
    %v355 = vld [vmem:[#allocation13 + $0x818] sm:$0xff]
    %v356 = vld [vmem:[#allocation13 + $0x820] sm:$0xff]
    %v357 = vld [vmem:[#allocation13 + $0x828] sm:$0xff]
    %v358 = vld [vmem:[#allocation13 + $0x830] sm:$0xff]
    %v359 = vld [vmem:[#allocation13 + $0x838] sm:$0xff]
    %v360 = vld [vmem:[#allocation13 + $0x840] sm:$0xff]
    %v361 = vld [vmem:[#allocation13 + $0x848] sm:$0xff]
    %v362 = vld [vmem:[#allocation13 + $0x850] sm:$0xff]
    %v363 = vld [vmem:[#allocation13 + $0x858] sm:$0xff]
    %v364 = vld [vmem:[#allocation13 + $0x860] sm:$0xff]
    %v365 = vld [vmem:[#allocation13 + $0x868] sm:$0xff]
    %v366 = vld [vmem:[#allocation13 + $0x870] sm:$0xff]
    %v367 = vld [vmem:[#allocation13 + $0x878] sm:$0xff]
    %v368 = vld [vmem:[#allocation13 + $0x880] sm:$0xff]
    %v369 = vld [vmem:[#allocation13 + $0x888] sm:$0xff]
    %v370 = vld [vmem:[#allocation13 + $0x890] sm:$0xff]
    %v371 = vld [vmem:[#allocation13 + $0x898] sm:$0xff]
    %v372 = vld [vmem:[#allocation13 + $0x8a0] sm:$0xff]
    %v373 = vld [vmem:[#allocation13 + $0x8a8] sm:$0xff]
    %v374 = vld [vmem:[#allocation13 + $0x8b0] sm:$0xff]
    %v375 = vld [vmem:[#allocation13 + $0x8b8] sm:$0xff]
    %v376 = vld [vmem:[#allocation13 + $0x8c0] sm:$0xff]
    %v377 = vld [vmem:[#allocation13 + $0x8c8] sm:$0xff]
    %v378 = vld [vmem:[#allocation13 + $0x8d0] sm:$0xff]
    %v379 = vld [vmem:[#allocation13 + $0x8d8] sm:$0xff]
    %v380 = vld [vmem:[#allocation13 + $0x8e0] sm:$0xff]
    %v381 = vld [vmem:[#allocation13 + $0x8e8] sm:$0xff]
    %v382 = vld [vmem:[#allocation13 + $0x8f0] sm:$0xff]
    %v383 = vld [vmem:[#allocation13 + $0x8f8] sm:$0xff]
    %v384 = vld [vmem:[#allocation13 + $0x900] sm:$0xff]
    %v385 = vld [vmem:[#allocation13 + $0x908] sm:$0xff]
    %v386 = vld [vmem:[#allocation13 + $0x910] sm:$0xff]
    %v387 = vld [vmem:[#allocation13 + $0x918] sm:$0xff]
    %v388 = vld [vmem:[#allocation13 + $0x920] sm:$0xff]
    %v389 = vld [vmem:[#allocation13 + $0x928] sm:$0xff]
    %v390 = vld [vmem:[#allocation13 + $0x930] sm:$0xff]
    %v391 = vld [vmem:[#allocation13 + $0x938] sm:$0xff]
    %v392 = vld [vmem:[#allocation13 + $0x940] sm:$0xff]
    %v393 = vld [vmem:[#allocation13 + $0x948] sm:$0xff]
    %v394 = vld [vmem:[#allocation13 + $0x950] sm:$0xff]
    %v395 = vld [vmem:[#allocation13 + $0x958] sm:$0xff]
    %v396 = vld [vmem:[#allocation13 + $0x960] sm:$0xff]
    %v397 = vld [vmem:[#allocation13 + $0x968] sm:$0xff]
    %v398 = vld [vmem:[#allocation13 + $0x970] sm:$0xff]
    %v399 = vld [vmem:[#allocation13 + $0x978] sm:$0xff]
    %v400 = vld [vmem:[#allocation13 + $0x980] sm:$0xff]
    %v401 = vld [vmem:[#allocation13 + $0x988] sm:$0xff]
    %v402 = vld [vmem:[#allocation13 + $0x990] sm:$0xff]
    %v403 = vld [vmem:[#allocation13 + $0x998] sm:$0xff]
    %v404 = vld [vmem:[#allocation13 + $0x9a0] sm:$0xff]
    %v405 = vld [vmem:[#allocation13 + $0x9a8] sm:$0xff]
    %v406 = vld [vmem:[#allocation13 + $0x9b0] sm:$0xff]
    %v407 = vld [vmem:[#allocation13 + $0x9b8] sm:$0xff]
    %v408 = vld [vmem:[#allocation13 + $0x9c0] sm:$0xff]
    %v409 = vld [vmem:[#allocation13 + $0x9c8] sm:$0xff]
    %v410 = vld [vmem:[#allocation13 + $0x9d0] sm:$0xff]
    %v411 = vld [vmem:[#allocation13 + $0x9d8] sm:$0xff]
    %v412 = vld [vmem:[#allocation13 + $0x9e0] sm:$0xff]
    %v413 = vld [vmem:[#allocation13 + $0x9e8] sm:$0xff]
    %v414 = vld [vmem:[#allocation13 + $0x9f0] sm:$0xff]
    %v415 = vld [vmem:[#allocation13 + $0x9f8] sm:$0xff]
    %416 = vmatprep.subr.mxu0 %v157
    %417 = vmatpush1.msra.mxu0 %v156
    %418 = vmatprep.subr.mxu0 %v153
    %419 = vmatpush1.msra.mxu0 %v152
    %420 = vmatprep.subr.mxu0 %v149
    %421 = vmatpush1.msra.mxu0 %v148
    %422 = vmatprep.subr.mxu0 %v145
    %423 = vmatpush1.msra.mxu0 %v144
    %424 = vmatprep.subr.mxu0 %v141
    %425 = vmatpush1.msra.mxu0 %v140
    %426 = vmatprep.subr.mxu0 %v137
    %427 = vmatpush1.msra.mxu0 %v136
    %428 = vmatprep.subr.mxu0 %v133
    %429 = vmatpush1.msra.mxu0 %v132
    %430 = vmatprep.subr.mxu0 %v129
    %431 = vmatpush1.msra.mxu0 %v128
    %432 = vmatprep.subr.mxu0 %v125
    %433 = vmatpush1.msra.mxu0 %v124
    %434 = vmatprep.subr.mxu0 %v121
    %435 = vmatpush1.msra.mxu0 %v120
    %436 = vmatprep.subr.mxu0 %v117
    %437 = vmatpush1.msra.mxu0 %v116
    %438 = vmatprep.subr.mxu0 %v113
    %439 = vmatpush1.msra.mxu0 %v112
    %440 = vmatprep.subr.mxu0 %v109
    %441 = vmatpush1.msra.mxu0 %v108
    %442 = vmatprep.subr.mxu0 %v105
    %443 = vmatpush1.msra.mxu0 %v104
    %444 = vmatprep.subr.mxu0 %v101
    %445 = vmatpush1.msra.mxu0 %v100
    %446 = vmatprep.subr.mxu0 %v97
    %447 = vmatpush1.msra.mxu0 %v96
    %448 = vmatprep.subr.mxu0 %v221
    %449 = vmatpush2.msra.mxu0 %v220
    %450 = vmatprep.subr.mxu0 %v217
    %451 = vmatpush2.msra.mxu0 %v216
    %452 = vmatprep.subr.mxu0 %v213
    %453 = vmatpush2.msra.mxu0 %v212
    %454 = vmatprep.subr.mxu0 %v209
    %455 = vmatpush2.msra.mxu0 %v208
    %456 = vmatprep.subr.mxu0 %v205
    %457 = vmatpush2.msra.mxu0 %v204
    %458 = vmatprep.subr.mxu0 %v201
    %459 = vmatpush2.msra.mxu0 %v200
    %460 = vmatprep.subr.mxu0 %v197
    %461 = vmatpush2.msra.mxu0 %v196
    %462 = vmatprep.subr.mxu0 %v193
    %463 = vmatpush2.msra.mxu0 %v192
    %464 = vmatprep.subr.mxu0 %v189
    %465 = vmatpush2.msra.mxu0 %v188
    %466 = vmatprep.subr.mxu0 %v185
    %467 = vmatpush2.msra.mxu0 %v184
    %468 = vmatprep.subr.mxu0 %v181
    %469 = vmatpush2.msra.mxu0 %v180
    %470 = vmatprep.subr.mxu0 %v177
    %471 = vmatpush2.msra.mxu0 %v176
    %472 = vmatprep.subr.mxu0 %v173
    %473 = vmatpush2.msra.mxu0 %v172
    %474 = vmatprep.subr.mxu0 %v169
    %475 = vmatpush2.msra.mxu0 %v168
    %476 = vmatprep.subr.mxu0 %v165
    %477 = vmatpush2.msra.mxu0 %v164
    %478 = vmatprep.subr.mxu0 %v161
    %479 = vmatpush2.msra.mxu0 %v160
    %480 = vmatprep.mubr.f32.mxu0 %v92
    %481 = vmatmul.mubr.f32.gmra.mxu0 %v91
    %v482 = vpop.f32.mrf.mxu0
    %v483 = vadd.f32 0.0, %v482
    %v484 = vpop.f32.mrf.mxu0
    %v485 = vadd.f32 0.0, %v484
    %486 = vdwg.mxu0
    %487 = vmatprep.subr.mxu0 %v285
    %488 = vmatpush1.msra.mxu0 %v284
    %489 = vmatprep.subr.mxu0 %v281
    %490 = vmatpush1.msra.mxu0 %v280
    %491 = vmatprep.subr.mxu0 %v277
    %492 = vmatpush1.msra.mxu0 %v276
    %493 = vmatprep.subr.mxu0 %v273
    %494 = vmatpush1.msra.mxu0 %v272
    %495 = vmatprep.subr.mxu0 %v269
    %496 = vmatpush1.msra.mxu0 %v268
    %497 = vmatprep.subr.mxu0 %v265
    %498 = vmatpush1.msra.mxu0 %v264
    %499 = vmatprep.subr.mxu0 %v261
    %500 = vmatpush1.msra.mxu0 %v260
    %501 = vmatprep.subr.mxu0 %v257
    %502 = vmatpush1.msra.mxu0 %v256
    %503 = vmatprep.subr.mxu0 %v253
    %504 = vmatpush1.msra.mxu0 %v252
    %505 = vmatprep.subr.mxu0 %v249
    %506 = vmatpush1.msra.mxu0 %v248
    %507 = vmatprep.subr.mxu0 %v245
    %508 = vmatpush1.msra.mxu0 %v244
    %509 = vmatprep.subr.mxu0 %v241
    %510 = vmatpush1.msra.mxu0 %v240
    %511 = vmatprep.subr.mxu0 %v237
    %512 = vmatpush1.msra.mxu0 %v236
    %513 = vmatprep.subr.mxu0 %v233
    %514 = vmatpush1.msra.mxu0 %v232
    %515 = vmatprep.subr.mxu0 %v229
    %516 = vmatpush1.msra.mxu0 %v228
    %517 = vmatprep.subr.mxu0 %v225
    %518 = vmatpush1.msra.mxu0 %v224
    %519 = vmatprep.subr.mxu0 %v349
    %520 = vmatpush2.msra.mxu0 %v348
    %521 = vmatprep.subr.mxu0 %v345
    %522 = vmatpush2.msra.mxu0 %v344
    %523 = vmatprep.subr.mxu0 %v341
    %524 = vmatpush2.msra.mxu0 %v340
    %525 = vmatprep.subr.mxu0 %v337
    %526 = vmatpush2.msra.mxu0 %v336
    %527 = vmatprep.subr.mxu0 %v333
    %528 = vmatpush2.msra.mxu0 %v332
    %529 = vmatprep.subr.mxu0 %v329
    %530 = vmatpush2.msra.mxu0 %v328
    %531 = vmatprep.subr.mxu0 %v325
    %532 = vmatpush2.msra.mxu0 %v324
    %533 = vmatprep.subr.mxu0 %v321
    %534 = vmatpush2.msra.mxu0 %v320
    %535 = vmatprep.subr.mxu0 %v317
    %536 = vmatpush2.msra.mxu0 %v316
    %537 = vmatprep.subr.mxu0 %v313
    %538 = vmatpush2.msra.mxu0 %v312
    %539 = vmatprep.subr.mxu0 %v309
    %540 = vmatpush2.msra.mxu0 %v308
    %541 = vmatprep.subr.mxu0 %v305
    %542 = vmatpush2.msra.mxu0 %v304
    %543 = vmatprep.subr.mxu0 %v301
    %544 = vmatpush2.msra.mxu0 %v300
    %545 = vmatprep.subr.mxu0 %v297
    %546 = vmatpush2.msra.mxu0 %v296
    %547 = vmatprep.subr.mxu0 %v293
    %548 = vmatpush2.msra.mxu0 %v292
    %549 = vmatprep.subr.mxu0 %v289
    %550 = vmatpush2.msra.mxu0 %v288
    %551 = vmatprep.mubr.f32.mxu0 %v94
    %552 = vmatmul.mubr.f32.gmra.mxu0 %v93
    %v553 = vpop.f32.mrf.mxu0
    %v554 = vadd.f32 %v483, %v553
    %v555 = vpop.f32.mrf.mxu0
    %v556 = vadd.f32 %v485, %v555
    %557 = vdwg.mxu0
    %558 = vmatprep.subr.mxu0 %v413
    %559 = vmatpush1.msra.mxu0 %v412
    %560 = vmatprep.subr.mxu0 %v409
    %561 = vmatpush1.msra.mxu0 %v408
    %562 = vmatprep.subr.mxu0 %v405
    %563 = vmatpush1.msra.mxu0 %v404
    %564 = vmatprep.subr.mxu0 %v401
    %565 = vmatpush1.msra.mxu0 %v400
    %566 = vmatprep.subr.mxu0 %v397
    %567 = vmatpush1.msra.mxu0 %v396
    %568 = vmatprep.subr.mxu0 %v393
    %569 = vmatpush1.msra.mxu0 %v392
    %570 = vmatprep.subr.mxu0 %v389
    %571 = vmatpush1.msra.mxu0 %v388
    %572 = vmatprep.subr.mxu0 %v385
    %573 = vmatpush1.msra.mxu0 %v384
    %574 = vmatprep.subr.mxu0 %v381
    %575 = vmatpush1.msra.mxu0 %v380
    %576 = vmatprep.subr.mxu0 %v377
    %577 = vmatpush1.msra.mxu0 %v376
    %578 = vmatprep.subr.mxu0 %v373
    %579 = vmatpush1.msra.mxu0 %v372
    %580 = vmatprep.subr.mxu0 %v369
    %581 = vmatpush1.msra.mxu0 %v368
    %582 = vmatprep.subr.mxu0 %v365
    %583 = vmatpush1.msra.mxu0 %v364
    %584 = vmatprep.subr.mxu0 %v361
    %585 = vmatpush1.msra.mxu0 %v360
    %586 = vmatprep.subr.mxu0 %v357
    %587 = vmatpush1.msra.mxu0 %v356
    %588 = vmatprep.subr.mxu0 %v353
    %589 = vmatpush1.msra.mxu0 %v352
    %590 = vmatprep.subr.mxu0 0.0
    %591 = vmatpush2.msra.mxu0 0.0
    %592 = vmatprep.subr.mxu0 0.0
    %593 = vmatpush2.msra.mxu0 0.0
    %594 = vmatprep.subr.mxu0 0.0
    %595 = vmatpush2.msra.mxu0 0.0
    %596 = vmatprep.subr.mxu0 0.0
    %597 = vmatpush2.msra.mxu0 0.0
    %598 = vmatprep.subr.mxu0 0.0
    %599 = vmatpush2.msra.mxu0 0.0
    %600 = vmatprep.subr.mxu0 0.0
    %601 = vmatpush2.msra.mxu0 0.0
    %602 = vmatprep.subr.mxu0 0.0
    %603 = vmatpush2.msra.mxu0 0.0
    %604 = vmatprep.subr.mxu0 0.0
    %605 = vmatpush2.msra.mxu0 0.0
    %606 = vmatprep.subr.mxu0 0.0
    %607 = vmatpush2.msra.mxu0 0.0
    %608 = vmatprep.subr.mxu0 0.0
    %609 = vmatpush2.msra.mxu0 0.0
    %610 = vmatprep.subr.mxu0 0.0
    %611 = vmatpush2.msra.mxu0 0.0
    %612 = vmatprep.subr.mxu0 0.0
    %613 = vmatpush2.msra.mxu0 0.0
    %614 = vmatprep.subr.mxu0 0.0
    %615 = vmatpush2.msra.mxu0 0.0
    %616 = vmatprep.subr.mxu0 0.0
    %617 = vmatpush2.msra.mxu0 0.0
    %618 = vmatprep.subr.mxu0 0.0
    %619 = vmatpush2.msra.mxu0 0.0
    %620 = vmatprep.subr.mxu0 0.0
    %621 = vmatpush2.msra.mxu0 0.0
    %622 = vmatprep.mubr.f32.mxu0 0.0
    %623 = vmatmul.mubr.f32.gmra.mxu0 %v95
    %v624 = vpop.f32.mrf.mxu0
    %v625 = vadd.f32 %v554, %v624
    %v626 = vpop.f32.mrf.mxu0
    %v627 = vadd.f32 %v556, %v626
    %628 = vdwg.mxu0
    %629 = vmatprep.subr.mxu0 %v159
    %630 = vmatpush1.msra.mxu0 %v158
    %631 = vmatprep.subr.mxu0 %v155
    %632 = vmatpush1.msra.mxu0 %v154
    %633 = vmatprep.subr.mxu0 %v151
    %634 = vmatpush1.msra.mxu0 %v150
    %635 = vmatprep.subr.mxu0 %v147
    %636 = vmatpush1.msra.mxu0 %v146
    %637 = vmatprep.subr.mxu0 %v143
    %638 = vmatpush1.msra.mxu0 %v142
    %639 = vmatprep.subr.mxu0 %v139
    %640 = vmatpush1.msra.mxu0 %v138
    %641 = vmatprep.subr.mxu0 %v135
    %642 = vmatpush1.msra.mxu0 %v134
    %643 = vmatprep.subr.mxu0 %v131
    %644 = vmatpush1.msra.mxu0 %v130
    %645 = vmatprep.subr.mxu0 %v127
    %646 = vmatpush1.msra.mxu0 %v126
    %647 = vmatprep.subr.mxu0 %v123
    %648 = vmatpush1.msra.mxu0 %v122
    %649 = vmatprep.subr.mxu0 %v119
    %650 = vmatpush1.msra.mxu0 %v118
    %651 = vmatprep.subr.mxu0 %v115
    %652 = vmatpush1.msra.mxu0 %v114
    %653 = vmatprep.subr.mxu0 %v111
    %654 = vmatpush1.msra.mxu0 %v110
    %655 = vmatprep.subr.mxu0 %v107
    %656 = vmatpush1.msra.mxu0 %v106
    %657 = vmatprep.subr.mxu0 %v103
    %658 = vmatpush1.msra.mxu0 %v102
    %659 = vmatprep.subr.mxu0 %v99
    %660 = vmatpush1.msra.mxu0 %v98
    %661 = vmatprep.subr.mxu0 %v223
    %662 = vmatpush2.msra.mxu0 %v222
    %663 = vmatprep.subr.mxu0 %v219
    %664 = vmatpush2.msra.mxu0 %v218
    %665 = vmatprep.subr.mxu0 %v215
    %666 = vmatpush2.msra.mxu0 %v214
    %667 = vmatprep.subr.mxu0 %v211
    %668 = vmatpush2.msra.mxu0 %v210
    %669 = vmatprep.subr.mxu0 %v207
    %670 = vmatpush2.msra.mxu0 %v206
    %671 = vmatprep.subr.mxu0 %v203
    %672 = vmatpush2.msra.mxu0 %v202
    %673 = vmatprep.subr.mxu0 %v199
    %674 = vmatpush2.msra.mxu0 %v198
    %675 = vmatprep.subr.mxu0 %v195
    %676 = vmatpush2.msra.mxu0 %v194
    %677 = vmatprep.subr.mxu0 %v191
    %678 = vmatpush2.msra.mxu0 %v190
    %679 = vmatprep.subr.mxu0 %v187
    %680 = vmatpush2.msra.mxu0 %v186
    %681 = vmatprep.subr.mxu0 %v183
    %682 = vmatpush2.msra.mxu0 %v182
    %683 = vmatprep.subr.mxu0 %v179
    %684 = vmatpush2.msra.mxu0 %v178
    %685 = vmatprep.subr.mxu0 %v175
    %686 = vmatpush2.msra.mxu0 %v174
    %687 = vmatprep.subr.mxu0 %v171
    %688 = vmatpush2.msra.mxu0 %v170
    %689 = vmatprep.subr.mxu0 %v167
    %690 = vmatpush2.msra.mxu0 %v166
    %691 = vmatprep.subr.mxu0 %v163
    %692 = vmatpush2.msra.mxu0 %v162
    %693 = vmatprep.mubr.f32.mxu0 %v92
    %694 = vmatmul.mubr.f32.gmra.mxu0 %v91
    %v695 = vpop.f32.mrf.mxu0
    %v696 = vadd.f32 0.0, %v695
    %v697 = vpop.f32.mrf.mxu0
    %v698 = vadd.f32 0.0, %v697
    %699 = vdwg.mxu0
    %700 = vmatprep.subr.mxu0 %v287
    %701 = vmatpush1.msra.mxu0 %v286
    %702 = vmatprep.subr.mxu0 %v283
    %703 = vmatpush1.msra.mxu0 %v282
    %704 = vmatprep.subr.mxu0 %v279
    %705 = vmatpush1.msra.mxu0 %v278
    %706 = vmatprep.subr.mxu0 %v275
    %707 = vmatpush1.msra.mxu0 %v274
    %708 = vmatprep.subr.mxu0 %v271
    %709 = vmatpush1.msra.mxu0 %v270
    %710 = vmatprep.subr.mxu0 %v267
    %711 = vmatpush1.msra.mxu0 %v266
    %712 = vmatprep.subr.mxu0 %v263
    %713 = vmatpush1.msra.mxu0 %v262
    %714 = vmatprep.subr.mxu0 %v259
    %715 = vmatpush1.msra.mxu0 %v258
    %716 = vmatprep.subr.mxu0 %v255
    %717 = vmatpush1.msra.mxu0 %v254
    %718 = vmatprep.subr.mxu0 %v251
    %719 = vmatpush1.msra.mxu0 %v250
    %720 = vmatprep.subr.mxu0 %v247
    %721 = vmatpush1.msra.mxu0 %v246
    %722 = vmatprep.subr.mxu0 %v243
    %723 = vmatpush1.msra.mxu0 %v242
    %724 = vmatprep.subr.mxu0 %v239
    %725 = vmatpush1.msra.mxu0 %v238
    %726 = vmatprep.subr.mxu0 %v235
    %727 = vmatpush1.msra.mxu0 %v234
    %728 = vmatprep.subr.mxu0 %v231
    %729 = vmatpush1.msra.mxu0 %v230
    %730 = vmatprep.subr.mxu0 %v227
    %731 = vmatpush1.msra.mxu0 %v226
    %732 = vmatprep.subr.mxu0 %v351
    %733 = vmatpush2.msra.mxu0 %v350
    %734 = vmatprep.subr.mxu0 %v347
    %735 = vmatpush2.msra.mxu0 %v346
    %736 = vmatprep.subr.mxu0 %v343
    %737 = vmatpush2.msra.mxu0 %v342
    %738 = vmatprep.subr.mxu0 %v339
    %739 = vmatpush2.msra.mxu0 %v338
    %740 = vmatprep.subr.mxu0 %v335
    %741 = vmatpush2.msra.mxu0 %v334
    %742 = vmatprep.subr.mxu0 %v331
    %743 = vmatpush2.msra.mxu0 %v330
    %744 = vmatprep.subr.mxu0 %v327
    %745 = vmatpush2.msra.mxu0 %v326
    %746 = vmatprep.subr.mxu0 %v323
    %747 = vmatpush2.msra.mxu0 %v322
    %748 = vmatprep.subr.mxu0 %v319
    %749 = vmatpush2.msra.mxu0 %v318
    %750 = vmatprep.subr.mxu0 %v315
    %751 = vmatpush2.msra.mxu0 %v314
    %752 = vmatprep.subr.mxu0 %v311
    %753 = vmatpush2.msra.mxu0 %v310
    %754 = vmatprep.subr.mxu0 %v307
    %755 = vmatpush2.msra.mxu0 %v306
    %756 = vmatprep.subr.mxu0 %v303
    %757 = vmatpush2.msra.mxu0 %v302
    %758 = vmatprep.subr.mxu0 %v299
    %759 = vmatpush2.msra.mxu0 %v298
    %760 = vmatprep.subr.mxu0 %v295
    %761 = vmatpush2.msra.mxu0 %v294
    %762 = vmatprep.subr.mxu0 %v291
    %763 = vmatpush2.msra.mxu0 %v290
    %764 = vmatprep.mubr.f32.mxu0 %v94
    %765 = vmatmul.mubr.f32.gmra.mxu0 %v93
    %v766 = vpop.f32.mrf.mxu0
    %v767 = vadd.f32 %v696, %v766
    %v768 = vpop.f32.mrf.mxu0
    %v769 = vadd.f32 %v698, %v768
    %770 = vdwg.mxu0
    %771 = vmatprep.subr.mxu0 %v415
    %772 = vmatpush1.msra.mxu0 %v414
    %773 = vmatprep.subr.mxu0 %v411
    %774 = vmatpush1.msra.mxu0 %v410
    %775 = vmatprep.subr.mxu0 %v407
    %776 = vmatpush1.msra.mxu0 %v406
    %777 = vmatprep.subr.mxu0 %v403
    %778 = vmatpush1.msra.mxu0 %v402
    %779 = vmatprep.subr.mxu0 %v399
    %780 = vmatpush1.msra.mxu0 %v398
    %781 = vmatprep.subr.mxu0 %v395
    %782 = vmatpush1.msra.mxu0 %v394
    %783 = vmatprep.subr.mxu0 %v391
    %784 = vmatpush1.msra.mxu0 %v390
    %785 = vmatprep.subr.mxu0 %v387
    %786 = vmatpush1.msra.mxu0 %v386
    %787 = vmatprep.subr.mxu0 %v383
    %788 = vmatpush1.msra.mxu0 %v382
    %789 = vmatprep.subr.mxu0 %v379
    %790 = vmatpush1.msra.mxu0 %v378
    %791 = vmatprep.subr.mxu0 %v375
    %792 = vmatpush1.msra.mxu0 %v374
    %793 = vmatprep.subr.mxu0 %v371
    %794 = vmatpush1.msra.mxu0 %v370
    %795 = vmatprep.subr.mxu0 %v367
    %796 = vmatpush1.msra.mxu0 %v366
    %797 = vmatprep.subr.mxu0 %v363
    %798 = vmatpush1.msra.mxu0 %v362
    %799 = vmatprep.subr.mxu0 %v359
    %800 = vmatpush1.msra.mxu0 %v358
    %801 = vmatprep.subr.mxu0 %v355
    %802 = vmatpush1.msra.mxu0 %v354
    %803 = vmatprep.subr.mxu0 0.0
    %804 = vmatpush2.msra.mxu0 0.0
    %805 = vmatprep.subr.mxu0 0.0
    %806 = vmatpush2.msra.mxu0 0.0
    %807 = vmatprep.subr.mxu0 0.0
    %808 = vmatpush2.msra.mxu0 0.0
    %809 = vmatprep.subr.mxu0 0.0
    %810 = vmatpush2.msra.mxu0 0.0
    %811 = vmatprep.subr.mxu0 0.0
    %812 = vmatpush2.msra.mxu0 0.0
    %813 = vmatprep.subr.mxu0 0.0
    %814 = vmatpush2.msra.mxu0 0.0
    %815 = vmatprep.subr.mxu0 0.0
    %816 = vmatpush2.msra.mxu0 0.0
    %817 = vmatprep.subr.mxu0 0.0
    %818 = vmatpush2.msra.mxu0 0.0
    %819 = vmatprep.subr.mxu0 0.0
    %820 = vmatpush2.msra.mxu0 0.0
    %821 = vmatprep.subr.mxu0 0.0
    %822 = vmatpush2.msra.mxu0 0.0
    %823 = vmatprep.subr.mxu0 0.0
    %824 = vmatpush2.msra.mxu0 0.0
    %825 = vmatprep.subr.mxu0 0.0
    %826 = vmatpush2.msra.mxu0 0.0
    %827 = vmatprep.subr.mxu0 0.0
    %828 = vmatpush2.msra.mxu0 0.0
    %829 = vmatprep.subr.mxu0 0.0
    %830 = vmatpush2.msra.mxu0 0.0
    %831 = vmatprep.subr.mxu0 0.0
    %832 = vmatpush2.msra.mxu0 0.0
    %833 = vmatprep.subr.mxu0 0.0
    %834 = vmatpush2.msra.mxu0 0.0
    %835 = vmatprep.mubr.f32.mxu0 0.0
    %836 = vmatmul.mubr.f32.gmra.mxu0 %v95
    %v837 = vpop.f32.mrf.mxu0
    %v838 = vadd.f32 %v767, %v837
    %v839 = vpop.f32.mrf.mxu0
    %v840 = vadd.f32 %v769, %v839
    %841 = vdwg.mxu0
    %842 = vst [vmem:[#allocation4] sm:$0xff] %v625
    %843 = vst [vmem:[#allocation4 + $0x8] sm:$0xff] %v627
    %844 = vst [vmem:[#allocation4 + $0x10] sm:$0xff] %v838
    %845 = vst [vmem:[#allocation4 + $0x18] sm:$0xff] %v840
    %v846 = vld [vmem:[#allocation2] sm:$0x1]
    %847 = vst [vmem:[#allocation3] sm:$0x1] %v846
    %v848 = vld [vmem:[#allocation4 + $0x18] ss:$0 sm:$0xff]
    %v849 = vld [vmem:[#allocation11] sm:$0xff]
    %v850 = vld [vmem:[#allocation11 + $0x8] sm:$0xff]
    %v851 = vld [vmem:[#allocation11 + $0x10] sm:$0xff]
    %v852 = vld [vmem:[#allocation11 + $0x18] sm:$0xff]
    %v853 = vld [vmem:[#allocation11 + $0x20] sm:$0xff]
    %v854 = vld [vmem:[#allocation11 + $0x28] sm:$0xff]
    %v855 = vld [vmem:[#allocation11 + $0x30] sm:$0xff]
    %v856 = vld [vmem:[#allocation11 + $0x38] sm:$0xff]
    %v857 = vld [vmem:[#allocation11 + $0x40] sm:$0xff]
    %v858 = vld [vmem:[#allocation11 + $0x48] sm:$0xff]
    %v859 = vld [vmem:[#allocation11 + $0x50] sm:$0xff]
    %v860 = vld [vmem:[#allocation11 + $0x58] sm:$0xff]
    %v861 = vld [vmem:[#allocation11 + $0x60] sm:$0xff]
    %v862 = vld [vmem:[#allocation11 + $0x68] sm:$0xff]
    %v863 = vld [vmem:[#allocation11 + $0x70] sm:$0xff]
    %v864 = vld [vmem:[#allocation11 + $0x78] sm:$0xff]
    %865 = vmatprep.subr.mxu0 0.0
    %866 = vmatpush1.msra.mxu0 %v864
    %867 = vmatprep.subr.mxu0 0.0
    %868 = vmatpush1.msra.mxu0 %v863
    %869 = vmatprep.subr.mxu0 0.0
    %870 = vmatpush1.msra.mxu0 %v862
    %871 = vmatprep.subr.mxu0 0.0
    %872 = vmatpush1.msra.mxu0 %v861
    %873 = vmatprep.subr.mxu0 0.0
    %874 = vmatpush1.msra.mxu0 %v860
    %875 = vmatprep.subr.mxu0 0.0
    %876 = vmatpush1.msra.mxu0 %v859
    %877 = vmatprep.subr.mxu0 0.0
    %878 = vmatpush1.msra.mxu0 %v858
    %879 = vmatprep.subr.mxu0 0.0
    %880 = vmatpush1.msra.mxu0 %v857
    %881 = vmatprep.subr.mxu0 0.0
    %882 = vmatpush1.msra.mxu0 %v856
    %883 = vmatprep.subr.mxu0 0.0
    %884 = vmatpush1.msra.mxu0 %v855
    %885 = vmatprep.subr.mxu0 0.0
    %886 = vmatpush1.msra.mxu0 %v854
    %887 = vmatprep.subr.mxu0 0.0
    %888 = vmatpush1.msra.mxu0 %v853
    %889 = vmatprep.subr.mxu0 0.0
    %890 = vmatpush1.msra.mxu0 %v852
    %891 = vmatprep.subr.mxu0 0.0
    %892 = vmatpush1.msra.mxu0 %v851
    %893 = vmatprep.subr.mxu0 0.0
    %894 = vmatpush1.msra.mxu0 %v850
    %895 = vmatprep.subr.mxu0 0.0
    %896 = vmatpush1.msra.mxu0 %v849
    %897 = vmatprep.subr.mxu0 0.0
    %898 = vmatpush2.msra.mxu0 0.0
    %899 = vmatprep.subr.mxu0 0.0
    %900 = vmatpush2.msra.mxu0 0.0
    %901 = vmatprep.subr.mxu0 0.0
    %902 = vmatpush2.msra.mxu0 0.0
    %903 = vmatprep.subr.mxu0 0.0
    %904 = vmatpush2.msra.mxu0 0.0
    %905 = vmatprep.subr.mxu0 0.0
    %906 = vmatpush2.msra.mxu0 0.0
    %907 = vmatprep.subr.mxu0 0.0
    %908 = vmatpush2.msra.mxu0 0.0
    %909 = vmatprep.subr.mxu0 0.0
    %910 = vmatpush2.msra.mxu0 0.0
    %911 = vmatprep.subr.mxu0 0.0
    %912 = vmatpush2.msra.mxu0 0.0
    %913 = vmatprep.subr.mxu0 0.0
    %914 = vmatpush2.msra.mxu0 0.0
    %915 = vmatprep.subr.mxu0 0.0
    %916 = vmatpush2.msra.mxu0 0.0
    %917 = vmatprep.subr.mxu0 0.0
    %918 = vmatpush2.msra.mxu0 0.0
    %919 = vmatprep.subr.mxu0 0.0
    %920 = vmatpush2.msra.mxu0 0.0
    %921 = vmatprep.subr.mxu0 0.0
    %922 = vmatpush2.msra.mxu0 0.0
    %923 = vmatprep.subr.mxu0 0.0
    %924 = vmatpush2.msra.mxu0 0.0
    %925 = vmatprep.subr.mxu0 0.0
    %926 = vmatpush2.msra.mxu0 0.0
    %927 = vmatprep.subr.mxu0 0.0
    %928 = vmatpush2.msra.mxu0 0.0
    %929 = vmatprep.mubr.f32.mxu0 0.0
    %930 = vmatmul.mubr.f32.gmra.mxu0 %v846
    %v931 = vpop.f32.mrf.mxu0
    %v932 = vadd.f32 %v848, %v931
    %v933 = vpop.f32.mrf.mxu0
    %934 = vdwg.mxu0
    %935 = vst [vmem:[#allocation3 + $0x1] sm:$0x1] %v932
    %v936 = vld [vmem:[#allocation4 + $0x19] ss:$0 sm:$0xff]
    %v937 = vld [vmem:[#allocation11] sm:$0xff]
    %v938 = vld [vmem:[#allocation11 + $0x8] sm:$0xff]
    %v939 = vld [vmem:[#allocation11 + $0x10] sm:$0xff]
    %v940 = vld [vmem:[#allocation11 + $0x18] sm:$0xff]
    %v941 = vld [vmem:[#allocation11 + $0x20] sm:$0xff]
    %v942 = vld [vmem:[#allocation11 + $0x28] sm:$0xff]
    %v943 = vld [vmem:[#allocation11 + $0x30] sm:$0xff]
    %v944 = vld [vmem:[#allocation11 + $0x38] sm:$0xff]
    %v945 = vld [vmem:[#allocation11 + $0x40] sm:$0xff]
    %v946 = vld [vmem:[#allocation11 + $0x48] sm:$0xff]
    %v947 = vld [vmem:[#allocation11 + $0x50] sm:$0xff]
    %v948 = vld [vmem:[#allocation11 + $0x58] sm:$0xff]
    %v949 = vld [vmem:[#allocation11 + $0x60] sm:$0xff]
    %v950 = vld [vmem:[#allocation11 + $0x68] sm:$0xff]
    %v951 = vld [vmem:[#allocation11 + $0x70] sm:$0xff]
    %v952 = vld [vmem:[#allocation11 + $0x78] sm:$0xff]
    %953 = vmatprep.subr.mxu0 0.0
    %954 = vmatpush1.msra.mxu0 %v952
    %955 = vmatprep.subr.mxu0 0.0
    %956 = vmatpush1.msra.mxu0 %v951
    %957 = vmatprep.subr.mxu0 0.0
    %958 = vmatpush1.msra.mxu0 %v950
    %959 = vmatprep.subr.mxu0 0.0
    %960 = vmatpush1.msra.mxu0 %v949
    %961 = vmatprep.subr.mxu0 0.0
    %962 = vmatpush1.msra.mxu0 %v948
    %963 = vmatprep.subr.mxu0 0.0
    %964 = vmatpush1.msra.mxu0 %v947
    %965 = vmatprep.subr.mxu0 0.0
    %966 = vmatpush1.msra.mxu0 %v946
    %967 = vmatprep.subr.mxu0 0.0
    %968 = vmatpush1.msra.mxu0 %v945
    %969 = vmatprep.subr.mxu0 0.0
    %970 = vmatpush1.msra.mxu0 %v944
    %971 = vmatprep.subr.mxu0 0.0
    %972 = vmatpush1.msra.mxu0 %v943
    %973 = vmatprep.subr.mxu0 0.0
    %974 = vmatpush1.msra.mxu0 %v942
    %975 = vmatprep.subr.mxu0 0.0
    %976 = vmatpush1.msra.mxu0 %v941
    %977 = vmatprep.subr.mxu0 0.0
    %978 = vmatpush1.msra.mxu0 %v940
    %979 = vmatprep.subr.mxu0 0.0
    %980 = vmatpush1.msra.mxu0 %v939
    %981 = vmatprep.subr.mxu0 0.0
    %982 = vmatpush1.msra.mxu0 %v938
    %983 = vmatprep.subr.mxu0 0.0
    %984 = vmatpush1.msra.mxu0 %v937
    %985 = vmatprep.subr.mxu0 0.0
    %986 = vmatpush2.msra.mxu0 0.0
    %987 = vmatprep.subr.mxu0 0.0
    %988 = vmatpush2.msra.mxu0 0.0
    %989 = vmatprep.subr.mxu0 0.0
    %990 = vmatpush2.msra.mxu0 0.0
    %991 = vmatprep.subr.mxu0 0.0
    %992 = vmatpush2.msra.mxu0 0.0
    %993 = vmatprep.subr.mxu0 0.0
    %994 = vmatpush2.msra.mxu0 0.0
    %995 = vmatprep.subr.mxu0 0.0
    %996 = vmatpush2.msra.mxu0 0.0
    %997 = vmatprep.subr.mxu0 0.0
    %998 = vmatpush2.msra.mxu0 0.0
    %999 = vmatprep.subr.mxu0 0.0
    %1000 = vmatpush2.msra.mxu0 0.0
    %1001 = vmatprep.subr.mxu0 0.0
    %1002 = vmatpush2.msra.mxu0 0.0
    %1003 = vmatprep.subr.mxu0 0.0
    %1004 = vmatpush2.msra.mxu0 0.0
    %1005 = vmatprep.subr.mxu0 0.0
    %1006 = vmatpush2.msra.mxu0 0.0
    %1007 = vmatprep.subr.mxu0 0.0
    %1008 = vmatpush2.msra.mxu0 0.0
    %1009 = vmatprep.subr.mxu0 0.0
    %1010 = vmatpush2.msra.mxu0 0.0
    %1011 = vmatprep.subr.mxu0 0.0
    %1012 = vmatpush2.msra.mxu0 0.0
    %1013 = vmatprep.subr.mxu0 0.0
    %1014 = vmatpush2.msra.mxu0 0.0
    %1015 = vmatprep.subr.mxu0 0.0
    %1016 = vmatpush2.msra.mxu0 0.0
    %1017 = vmatprep.mubr.f32.mxu0 0.0
    %1018 = vmatmul.mubr.f32.gmra.mxu0 %v932
    %v1019 = vpop.f32.mrf.mxu0
    %v1020 = vadd.f32 %v936, %v1019
    %v1021 = vpop.f32.mrf.mxu0
    %1022 = vdwg.mxu0
    %1023 = vst [vmem:[#allocation3 + $0x2] sm:$0x1] %v1020
    %v1024 = vld [vmem:[#allocation4 + $0x1a] ss:$0 sm:$0xff]
    %v1025 = vld [vmem:[#allocation11] sm:$0xff]
    %v1026 = vld [vmem:[#allocation11 + $0x8] sm:$0xff]
    %v1027 = vld [vmem:[#allocation11 + $0x10] sm:$0xff]
    %v1028 = vld [vmem:[#allocation11 + $0x18] sm:$0xff]
    %v1029 = vld [vmem:[#allocation11 + $0x20] sm:$0xff]
    %v1030 = vld [vmem:[#allocation11 + $0x28] sm:$0xff]
    %v1031 = vld [vmem:[#allocation11 + $0x30] sm:$0xff]
    %v1032 = vld [vmem:[#allocation11 + $0x38] sm:$0xff]
    %v1033 = vld [vmem:[#allocation11 + $0x40] sm:$0xff]
    %v1034 = vld [vmem:[#allocation11 + $0x48] sm:$0xff]
    %v1035 = vld [vmem:[#allocation11 + $0x50] sm:$0xff]
    %v1036 = vld [vmem:[#allocation11 + $0x58] sm:$0xff]
    %v1037 = vld [vmem:[#allocation11 + $0x60] sm:$0xff]
    %v1038 = vld [vmem:[#allocation11 + $0x68] sm:$0xff]
    %v1039 = vld [vmem:[#allocation11 + $0x70] sm:$0xff]
    %v1040 = vld [vmem:[#allocation11 + $0x78] sm:$0xff]
    %1041 = vmatprep.subr.mxu0 0.0
    %1042 = vmatpush1.msra.mxu0 %v1040
    %1043 = vmatprep.subr.mxu0 0.0
    %1044 = vmatpush1.msra.mxu0 %v1039
    %1045 = vmatprep.subr.mxu0 0.0
    %1046 = vmatpush1.msra.mxu0 %v1038
    %1047 = vmatprep.subr.mxu0 0.0
    %1048 = vmatpush1.msra.mxu0 %v1037
    %1049 = vmatprep.subr.mxu0 0.0
    %1050 = vmatpush1.msra.mxu0 %v1036
    %1051 = vmatprep.subr.mxu0 0.0
    %1052 = vmatpush1.msra.mxu0 %v1035
    %1053 = vmatprep.subr.mxu0 0.0
    %1054 = vmatpush1.msra.mxu0 %v1034
    %1055 = vmatprep.subr.mxu0 0.0
    %1056 = vmatpush1.msra.mxu0 %v1033
    %1057 = vmatprep.subr.mxu0 0.0
    %1058 = vmatpush1.msra.mxu0 %v1032
    %1059 = vmatprep.subr.mxu0 0.0
    %1060 = vmatpush1.msra.mxu0 %v1031
    %1061 = vmatprep.subr.mxu0 0.0
    %1062 = vmatpush1.msra.mxu0 %v1030
    %1063 = vmatprep.subr.mxu0 0.0
    %1064 = vmatpush1.msra.mxu0 %v1029
    %1065 = vmatprep.subr.mxu0 0.0
    %1066 = vmatpush1.msra.mxu0 %v1028
    %1067 = vmatprep.subr.mxu0 0.0
    %1068 = vmatpush1.msra.mxu0 %v1027
    %1069 = vmatprep.subr.mxu0 0.0
    %1070 = vmatpush1.msra.mxu0 %v1026
    %1071 = vmatprep.subr.mxu0 0.0
    %1072 = vmatpush1.msra.mxu0 %v1025
    %1073 = vmatprep.subr.mxu0 0.0
    %1074 = vmatpush2.msra.mxu0 0.0
    %1075 = vmatprep.subr.mxu0 0.0
    %1076 = vmatpush2.msra.mxu0 0.0
    %1077 = vmatprep.subr.mxu0 0.0
    %1078 = vmatpush2.msra.mxu0 0.0
    %1079 = vmatprep.subr.mxu0 0.0
    %1080 = vmatpush2.msra.mxu0 0.0
    %1081 = vmatprep.subr.mxu0 0.0
    %1082 = vmatpush2.msra.mxu0 0.0
    %1083 = vmatprep.subr.mxu0 0.0
    %1084 = vmatpush2.msra.mxu0 0.0
    %1085 = vmatprep.subr.mxu0 0.0
    %1086 = vmatpush2.msra.mxu0 0.0
    %1087 = vmatprep.subr.mxu0 0.0
    %1088 = vmatpush2.msra.mxu0 0.0
    %1089 = vmatprep.subr.mxu0 0.0
    %1090 = vmatpush2.msra.mxu0 0.0
    %1091 = vmatprep.subr.mxu0 0.0
    %1092 = vmatpush2.msra.mxu0 0.0
    %1093 = vmatprep.subr.mxu0 0.0
    %1094 = vmatpush2.msra.mxu0 0.0
    %1095 = vmatprep.subr.mxu0 0.0
    %1096 = vmatpush2.msra.mxu0 0.0
    %1097 = vmatprep.subr.mxu0 0.0
    %1098 = vmatpush2.msra.mxu0 0.0
    %1099 = vmatprep.subr.mxu0 0.0
    %1100 = vmatpush2.msra.mxu0 0.0
    %1101 = vmatprep.subr.mxu0 0.0
    %1102 = vmatpush2.msra.mxu0 0.0
    %1103 = vmatprep.subr.mxu0 0.0
    %1104 = vmatpush2.msra.mxu0 0.0
    %1105 = vmatprep.mubr.f32.mxu0 0.0
    %1106 = vmatmul.mubr.f32.gmra.mxu0 %v1020
    %v1107 = vpop.f32.mrf.mxu0
    %v1108 = vadd.f32 %v1024, %v1107
    %v1109 = vpop.f32.mrf.mxu0
    %1110 = vdwg.mxu0
    %1111 = vst [vmem:[#allocation3 + $0x3] sm:$0x1] %v1108
    %v1112 = vld [vmem:[#allocation4 + $0x1b] ss:$0 sm:$0xff]
    %v1113 = vld [vmem:[#allocation11] sm:$0xff]
    %v1114 = vld [vmem:[#allocation11 + $0x8] sm:$0xff]
    %v1115 = vld [vmem:[#allocation11 + $0x10] sm:$0xff]
    %v1116 = vld [vmem:[#allocation11 + $0x18] sm:$0xff]
    %v1117 = vld [vmem:[#allocation11 + $0x20] sm:$0xff]
    %v1118 = vld [vmem:[#allocation11 + $0x28] sm:$0xff]
    %v1119 = vld [vmem:[#allocation11 + $0x30] sm:$0xff]
    %v1120 = vld [vmem:[#allocation11 + $0x38] sm:$0xff]
    %v1121 = vld [vmem:[#allocation11 + $0x40] sm:$0xff]
    %v1122 = vld [vmem:[#allocation11 + $0x48] sm:$0xff]
    %v1123 = vld [vmem:[#allocation11 + $0x50] sm:$0xff]
    %v1124 = vld [vmem:[#allocation11 + $0x58] sm:$0xff]
    %v1125 = vld [vmem:[#allocation11 + $0x60] sm:$0xff]
    %v1126 = vld [vmem:[#allocation11 + $0x68] sm:$0xff]
    %v1127 = vld [vmem:[#allocation11 + $0x70] sm:$0xff]
    %v1128 = vld [vmem:[#allocation11 + $0x78] sm:$0xff]
    %1129 = vmatprep.subr.mxu0 0.0
    %1130 = vmatpush1.msra.mxu0 %v1128
    %1131 = vmatprep.subr.mxu0 0.0
    %1132 = vmatpush1.msra.mxu0 %v1127
    %1133 = vmatprep.subr.mxu0 0.0
    %1134 = vmatpush1.msra.mxu0 %v1126
    %1135 = vmatprep.subr.mxu0 0.0
    %1136 = vmatpush1.msra.mxu0 %v1125
    %1137 = vmatprep.subr.mxu0 0.0
    %1138 = vmatpush1.msra.mxu0 %v1124
    %1139 = vmatprep.subr.mxu0 0.0
    %1140 = vmatpush1.msra.mxu0 %v1123
    %1141 = vmatprep.subr.mxu0 0.0
    %1142 = vmatpush1.msra.mxu0 %v1122
    %1143 = vmatprep.subr.mxu0 0.0
    %1144 = vmatpush1.msra.mxu0 %v1121
    %1145 = vmatprep.subr.mxu0 0.0
    %1146 = vmatpush1.msra.mxu0 %v1120
    %1147 = vmatprep.subr.mxu0 0.0
    %1148 = vmatpush1.msra.mxu0 %v1119
    %1149 = vmatprep.subr.mxu0 0.0
    %1150 = vmatpush1.msra.mxu0 %v1118
    %1151 = vmatprep.subr.mxu0 0.0
    %1152 = vmatpush1.msra.mxu0 %v1117
    %1153 = vmatprep.subr.mxu0 0.0
    %1154 = vmatpush1.msra.mxu0 %v1116
    %1155 = vmatprep.subr.mxu0 0.0
    %1156 = vmatpush1.msra.mxu0 %v1115
    %1157 = vmatprep.subr.mxu0 0.0
    %1158 = vmatpush1.msra.mxu0 %v1114
    %1159 = vmatprep.subr.mxu0 0.0
    %1160 = vmatpush1.msra.mxu0 %v1113
    %1161 = vmatprep.subr.mxu0 0.0
    %1162 = vmatpush2.msra.mxu0 0.0
    %1163 = vmatprep.subr.mxu0 0.0
    %1164 = vmatpush2.msra.mxu0 0.0
    %1165 = vmatprep.subr.mxu0 0.0
    %1166 = vmatpush2.msra.mxu0 0.0
    %1167 = vmatprep.subr.mxu0 0.0
    %1168 = vmatpush2.msra.mxu0 0.0
    %1169 = vmatprep.subr.mxu0 0.0
    %1170 = vmatpush2.msra.mxu0 0.0
    %1171 = vmatprep.subr.mxu0 0.0
    %1172 = vmatpush2.msra.mxu0 0.0
    %1173 = vmatprep.subr.mxu0 0.0
    %1174 = vmatpush2.msra.mxu0 0.0
    %1175 = vmatprep.subr.mxu0 0.0
    %1176 = vmatpush2.msra.mxu0 0.0
    %1177 = vmatprep.subr.mxu0 0.0
    %1178 = vmatpush2.msra.mxu0 0.0
    %1179 = vmatprep.subr.mxu0 0.0
    %1180 = vmatpush2.msra.mxu0 0.0
    %1181 = vmatprep.subr.mxu0 0.0
    %1182 = vmatpush2.msra.mxu0 0.0
    %1183 = vmatprep.subr.mxu0 0.0
    %1184 = vmatpush2.msra.mxu0 0.0
    %1185 = vmatprep.subr.mxu0 0.0
    %1186 = vmatpush2.msra.mxu0 0.0
    %1187 = vmatprep.subr.mxu0 0.0
    %1188 = vmatpush2.msra.mxu0 0.0
    %1189 = vmatprep.subr.mxu0 0.0
    %1190 = vmatpush2.msra.mxu0 0.0
    %1191 = vmatprep.subr.mxu0 0.0
    %1192 = vmatpush2.msra.mxu0 0.0
    %1193 = vmatprep.mubr.f32.mxu0 0.0
    %1194 = vmatmul.mubr.f32.gmra.mxu0 %v1108
    %v1195 = vpop.f32.mrf.mxu0
    %v1196 = vadd.f32 %v1112, %v1195
    %v1197 = vpop.f32.mrf.mxu0
    %1198 = vdwg.mxu0
    %1199 = vst [vmem:[#allocation3 + $0x4] sm:$0x1] %v1196
    %v1200 = vld [vmem:[#allocation4 + $0x1c] ss:$0 sm:$0xff]
    %v1201 = vld [vmem:[#allocation11] sm:$0xff]
    %v1202 = vld [vmem:[#allocation11 + $0x8] sm:$0xff]
    %v1203 = vld [vmem:[#allocation11 + $0x10] sm:$0xff]
    %v1204 = vld [vmem:[#allocation11 + $0x18] sm:$0xff]
    %v1205 = vld [vmem:[#allocation11 + $0x20] sm:$0xff]
    %v1206 = vld [vmem:[#allocation11 + $0x28] sm:$0xff]
    %v1207 = vld [vmem:[#allocation11 + $0x30] sm:$0xff]
    %v1208 = vld [vmem:[#allocation11 + $0x38] sm:$0xff]
    %v1209 = vld [vmem:[#allocation11 + $0x40] sm:$0xff]
    %v1210 = vld [vmem:[#allocation11 + $0x48] sm:$0xff]
    %v1211 = vld [vmem:[#allocation11 + $0x50] sm:$0xff]
    %v1212 = vld [vmem:[#allocation11 + $0x58] sm:$0xff]
    %v1213 = vld [vmem:[#allocation11 + $0x60] sm:$0xff]
    %v1214 = vld [vmem:[#allocation11 + $0x68] sm:$0xff]
    %v1215 = vld [vmem:[#allocation11 + $0x70] sm:$0xff]
    %v1216 = vld [vmem:[#allocation11 + $0x78] sm:$0xff]
    %1217 = vmatprep.subr.mxu0 0.0
    %1218 = vmatpush1.msra.mxu0 %v1216
    %1219 = vmatprep.subr.mxu0 0.0
    %1220 = vmatpush1.msra.mxu0 %v1215
    %1221 = vmatprep.subr.mxu0 0.0
    %1222 = vmatpush1.msra.mxu0 %v1214
    %1223 = vmatprep.subr.mxu0 0.0
    %1224 = vmatpush1.msra.mxu0 %v1213
    %1225 = vmatprep.subr.mxu0 0.0
    %1226 = vmatpush1.msra.mxu0 %v1212
    %1227 = vmatprep.subr.mxu0 0.0
    %1228 = vmatpush1.msra.mxu0 %v1211
    %1229 = vmatprep.subr.mxu0 0.0
    %1230 = vmatpush1.msra.mxu0 %v1210
    %1231 = vmatprep.subr.mxu0 0.0
    %1232 = vmatpush1.msra.mxu0 %v1209
    %1233 = vmatprep.subr.mxu0 0.0
    %1234 = vmatpush1.msra.mxu0 %v1208
    %1235 = vmatprep.subr.mxu0 0.0
    %1236 = vmatpush1.msra.mxu0 %v1207
    %1237 = vmatprep.subr.mxu0 0.0
    %1238 = vmatpush1.msra.mxu0 %v1206
    %1239 = vmatprep.subr.mxu0 0.0
    %1240 = vmatpush1.msra.mxu0 %v1205
    %1241 = vmatprep.subr.mxu0 0.0
    %1242 = vmatpush1.msra.mxu0 %v1204
    %1243 = vmatprep.subr.mxu0 0.0
    %1244 = vmatpush1.msra.mxu0 %v1203
    %1245 = vmatprep.subr.mxu0 0.0
    %1246 = vmatpush1.msra.mxu0 %v1202
    %1247 = vmatprep.subr.mxu0 0.0
    %1248 = vmatpush1.msra.mxu0 %v1201
    %1249 = vmatprep.subr.mxu0 0.0
    %1250 = vmatpush2.msra.mxu0 0.0
    %1251 = vmatprep.subr.mxu0 0.0
    %1252 = vmatpush2.msra.mxu0 0.0
    %1253 = vmatprep.subr.mxu0 0.0
    %1254 = vmatpush2.msra.mxu0 0.0
    %1255 = vmatprep.subr.mxu0 0.0
    %1256 = vmatpush2.msra.mxu0 0.0
    %1257 = vmatprep.subr.mxu0 0.0
    %1258 = vmatpush2.msra.mxu0 0.0
    %1259 = vmatprep.subr.mxu0 0.0
    %1260 = vmatpush2.msra.mxu0 0.0
    %1261 = vmatprep.subr.mxu0 0.0
    %1262 = vmatpush2.msra.mxu0 0.0
    %1263 = vmatprep.subr.mxu0 0.0
    %1264 = vmatpush2.msra.mxu0 0.0
    %1265 = vmatprep.subr.mxu0 0.0
    %1266 = vmatpush2.msra.mxu0 0.0
    %1267 = vmatprep.subr.mxu0 0.0
    %1268 = vmatpush2.msra.mxu0 0.0
    %1269 = vmatprep.subr.mxu0 0.0
    %1270 = vmatpush2.msra.mxu0 0.0
    %1271 = vmatprep.subr.mxu0 0.0
    %1272 = vmatpush2.msra.mxu0 0.0
    %1273 = vmatprep.subr.mxu0 0.0
    %1274 = vmatpush2.msra.mxu0 0.0
    %1275 = vmatprep.subr.mxu0 0.0
    %1276 = vmatpush2.msra.mxu0 0.0
    %1277 = vmatprep.subr.mxu0 0.0
    %1278 = vmatpush2.msra.mxu0 0.0
    %1279 = vmatprep.subr.mxu0 0.0
    %1280 = vmatpush2.msra.mxu0 0.0
    %1281 = vmatprep.mubr.f32.mxu0 0.0
    %1282 = vmatmul.mubr.f32.gmra.mxu0 %v1196
    %v1283 = vpop.f32.mrf.mxu0
    %v1284 = vadd.f32 %v1200, %v1283
    %v1285 = vpop.f32.mrf.mxu0
    %1286 = vdwg.mxu0
    %1287 = vst [vmem:[#allocation3 + $0x5] sm:$0x1] %v1284
    %v1288 = vld [vmem:[#allocation4 + $0x1d] ss:$0 sm:$0xff]
    %v1289 = vld [vmem:[#allocation11] sm:$0xff]
    %v1290 = vld [vmem:[#allocation11 + $0x8] sm:$0xff]
    %v1291 = vld [vmem:[#allocation11 + $0x10] sm:$0xff]
    %v1292 = vld [vmem:[#allocation11 + $0x18] sm:$0xff]
    %v1293 = vld [vmem:[#allocation11 + $0x20] sm:$0xff]
    %v1294 = vld [vmem:[#allocation11 + $0x28] sm:$0xff]
    %v1295 = vld [vmem:[#allocation11 + $0x30] sm:$0xff]
    %v1296 = vld [vmem:[#allocation11 + $0x38] sm:$0xff]
    %v1297 = vld [vmem:[#allocation11 + $0x40] sm:$0xff]
    %v1298 = vld [vmem:[#allocation11 + $0x48] sm:$0xff]
    %v1299 = vld [vmem:[#allocation11 + $0x50] sm:$0xff]
    %v1300 = vld [vmem:[#allocation11 + $0x58] sm:$0xff]
    %v1301 = vld [vmem:[#allocation11 + $0x60] sm:$0xff]
    %v1302 = vld [vmem:[#allocation11 + $0x68] sm:$0xff]
    %v1303 = vld [vmem:[#allocation11 + $0x70] sm:$0xff]
    %v1304 = vld [vmem:[#allocation11 + $0x78] sm:$0xff]
    %1305 = vmatprep.subr.mxu0 0.0
    %1306 = vmatpush1.msra.mxu0 %v1304
    %1307 = vmatprep.subr.mxu0 0.0
    %1308 = vmatpush1.msra.mxu0 %v1303
    %1309 = vmatprep.subr.mxu0 0.0
    %1310 = vmatpush1.msra.mxu0 %v1302
    %1311 = vmatprep.subr.mxu0 0.0
    %1312 = vmatpush1.msra.mxu0 %v1301
    %1313 = vmatprep.subr.mxu0 0.0
    %1314 = vmatpush1.msra.mxu0 %v1300
    %1315 = vmatprep.subr.mxu0 0.0
    %1316 = vmatpush1.msra.mxu0 %v1299
    %1317 = vmatprep.subr.mxu0 0.0
    %1318 = vmatpush1.msra.mxu0 %v1298
    %1319 = vmatprep.subr.mxu0 0.0
    %1320 = vmatpush1.msra.mxu0 %v1297
    %1321 = vmatprep.subr.mxu0 0.0
    %1322 = vmatpush1.msra.mxu0 %v1296
    %1323 = vmatprep.subr.mxu0 0.0
    %1324 = vmatpush1.msra.mxu0 %v1295
    %1325 = vmatprep.subr.mxu0 0.0
    %1326 = vmatpush1.msra.mxu0 %v1294
    %1327 = vmatprep.subr.mxu0 0.0
    %1328 = vmatpush1.msra.mxu0 %v1293
    %1329 = vmatprep.subr.mxu0 0.0
    %1330 = vmatpush1.msra.mxu0 %v1292
    %1331 = vmatprep.subr.mxu0 0.0
    %1332 = vmatpush1.msra.mxu0 %v1291
    %1333 = vmatprep.subr.mxu0 0.0
    %1334 = vmatpush1.msra.mxu0 %v1290
    %1335 = vmatprep.subr.mxu0 0.0
    %1336 = vmatpush1.msra.mxu0 %v1289
    %1337 = vmatprep.subr.mxu0 0.0
    %1338 = vmatpush2.msra.mxu0 0.0
    %1339 = vmatprep.subr.mxu0 0.0
    %1340 = vmatpush2.msra.mxu0 0.0
    %1341 = vmatprep.subr.mxu0 0.0
    %1342 = vmatpush2.msra.mxu0 0.0
    %1343 = vmatprep.subr.mxu0 0.0
    %1344 = vmatpush2.msra.mxu0 0.0
    %1345 = vmatprep.subr.mxu0 0.0
    %1346 = vmatpush2.msra.mxu0 0.0
    %1347 = vmatprep.subr.mxu0 0.0
    %1348 = vmatpush2.msra.mxu0 0.0
    %1349 = vmatprep.subr.mxu0 0.0
    %1350 = vmatpush2.msra.mxu0 0.0
    %1351 = vmatprep.subr.mxu0 0.0
    %1352 = vmatpush2.msra.mxu0 0.0
    %1353 = vmatprep.subr.mxu0 0.0
    %1354 = vmatpush2.msra.mxu0 0.0
    %1355 = vmatprep.subr.mxu0 0.0
    %1356 = vmatpush2.msra.mxu0 0.0
    %1357 = vmatprep.subr.mxu0 0.0
    %1358 = vmatpush2.msra.mxu0 0.0
    %1359 = vmatprep.subr.mxu0 0.0
    %1360 = vmatpush2.msra.mxu0 0.0
    %1361 = vmatprep.subr.mxu0 0.0
    %1362 = vmatpush2.msra.mxu0 0.0
    %1363 = vmatprep.subr.mxu0 0.0
    %1364 = vmatpush2.msra.mxu0 0.0
    %1365 = vmatprep.subr.mxu0 0.0
    %1366 = vmatpush2.msra.mxu0 0.0
    %1367 = vmatprep.subr.mxu0 0.0
    %1368 = vmatpush2.msra.mxu0 0.0
    %1369 = vmatprep.mubr.f32.mxu0 0.0
    %1370 = vmatmul.mubr.f32.gmra.mxu0 %v1284
    %v1371 = vpop.f32.mrf.mxu0
    %v1372 = vadd.f32 %v1288, %v1371
    %v1373 = vpop.f32.mrf.mxu0
    %1374 = vdwg.mxu0
    %1375 = vst [vmem:[#allocation3 + $0x6] sm:$0x1] %v1372
    %v1376 = vld [vmem:[#allocation4 + $0x1e] ss:$0 sm:$0xff]
    %v1377 = vld [vmem:[#allocation11] sm:$0xff]
    %v1378 = vld [vmem:[#allocation11 + $0x8] sm:$0xff]
    %v1379 = vld [vmem:[#allocation11 + $0x10] sm:$0xff]
    %v1380 = vld [vmem:[#allocation11 + $0x18] sm:$0xff]
    %v1381 = vld [vmem:[#allocation11 + $0x20] sm:$0xff]
    %v1382 = vld [vmem:[#allocation11 + $0x28] sm:$0xff]
    %v1383 = vld [vmem:[#allocation11 + $0x30] sm:$0xff]
    %v1384 = vld [vmem:[#allocation11 + $0x38] sm:$0xff]
    %v1385 = vld [vmem:[#allocation11 + $0x40] sm:$0xff]
    %v1386 = vld [vmem:[#allocation11 + $0x48] sm:$0xff]
    %v1387 = vld [vmem:[#allocation11 + $0x50] sm:$0xff]
    %v1388 = vld [vmem:[#allocation11 + $0x58] sm:$0xff]
    %v1389 = vld [vmem:[#allocation11 + $0x60] sm:$0xff]
    %v1390 = vld [vmem:[#allocation11 + $0x68] sm:$0xff]
    %v1391 = vld [vmem:[#allocation11 + $0x70] sm:$0xff]
    %v1392 = vld [vmem:[#allocation11 + $0x78] sm:$0xff]
    %1393 = vmatprep.subr.mxu0 0.0
    %1394 = vmatpush1.msra.mxu0 %v1392
    %1395 = vmatprep.subr.mxu0 0.0
    %1396 = vmatpush1.msra.mxu0 %v1391
    %1397 = vmatprep.subr.mxu0 0.0
    %1398 = vmatpush1.msra.mxu0 %v1390
    %1399 = vmatprep.subr.mxu0 0.0
    %1400 = vmatpush1.msra.mxu0 %v1389
    %1401 = vmatprep.subr.mxu0 0.0
    %1402 = vmatpush1.msra.mxu0 %v1388
    %1403 = vmatprep.subr.mxu0 0.0
    %1404 = vmatpush1.msra.mxu0 %v1387
    %1405 = vmatprep.subr.mxu0 0.0
    %1406 = vmatpush1.msra.mxu0 %v1386
    %1407 = vmatprep.subr.mxu0 0.0
    %1408 = vmatpush1.msra.mxu0 %v1385
    %1409 = vmatprep.subr.mxu0 0.0
    %1410 = vmatpush1.msra.mxu0 %v1384
    %1411 = vmatprep.subr.mxu0 0.0
    %1412 = vmatpush1.msra.mxu0 %v1383
    %1413 = vmatprep.subr.mxu0 0.0
    %1414 = vmatpush1.msra.mxu0 %v1382
    %1415 = vmatprep.subr.mxu0 0.0
    %1416 = vmatpush1.msra.mxu0 %v1381
    %1417 = vmatprep.subr.mxu0 0.0
    %1418 = vmatpush1.msra.mxu0 %v1380
    %1419 = vmatprep.subr.mxu0 0.0
    %1420 = vmatpush1.msra.mxu0 %v1379
    %1421 = vmatprep.subr.mxu0 0.0
    %1422 = vmatpush1.msra.mxu0 %v1378
    %1423 = vmatprep.subr.mxu0 0.0
    %1424 = vmatpush1.msra.mxu0 %v1377
    %1425 = vmatprep.subr.mxu0 0.0
    %1426 = vmatpush2.msra.mxu0 0.0
    %1427 = vmatprep.subr.mxu0 0.0
    %1428 = vmatpush2.msra.mxu0 0.0
    %1429 = vmatprep.subr.mxu0 0.0
    %1430 = vmatpush2.msra.mxu0 0.0
    %1431 = vmatprep.subr.mxu0 0.0
    %1432 = vmatpush2.msra.mxu0 0.0
    %1433 = vmatprep.subr.mxu0 0.0
    %1434 = vmatpush2.msra.mxu0 0.0
    %1435 = vmatprep.subr.mxu0 0.0
    %1436 = vmatpush2.msra.mxu0 0.0
    %1437 = vmatprep.subr.mxu0 0.0
    %1438 = vmatpush2.msra.mxu0 0.0
    %1439 = vmatprep.subr.mxu0 0.0
    %1440 = vmatpush2.msra.mxu0 0.0
    %1441 = vmatprep.subr.mxu0 0.0
    %1442 = vmatpush2.msra.mxu0 0.0
    %1443 = vmatprep.subr.mxu0 0.0
    %1444 = vmatpush2.msra.mxu0 0.0
    %1445 = vmatprep.subr.mxu0 0.0
    %1446 = vmatpush2.msra.mxu0 0.0
    %1447 = vmatprep.subr.mxu0 0.0
    %1448 = vmatpush2.msra.mxu0 0.0
    %1449 = vmatprep.subr.mxu0 0.0
    %1450 = vmatpush2.msra.mxu0 0.0
    %1451 = vmatprep.subr.mxu0 0.0
    %1452 = vmatpush2.msra.mxu0 0.0
    %1453 = vmatprep.subr.mxu0 0.0
    %1454 = vmatpush2.msra.mxu0 0.0
    %1455 = vmatprep.subr.mxu0 0.0
    %1456 = vmatpush2.msra.mxu0 0.0
    %1457 = vmatprep.mubr.f32.mxu0 0.0
    %1458 = vmatmul.mubr.f32.gmra.mxu0 %v1372
    %v1459 = vpop.f32.mrf.mxu0
    %v1460 = vadd.f32 %v1376, %v1459
    %v1461 = vpop.f32.mrf.mxu0
    %1462 = vdwg.mxu0
    %1463 = vst [vmem:[#allocation3 + $0x7] sm:$0x1] %v1460
    %v1464 = vld [vmem:[#allocation4 + $0x1f] ss:$0 sm:$0xff]
    %v1465 = vld [vmem:[#allocation11] sm:$0xff]
    %v1466 = vld [vmem:[#allocation11 + $0x8] sm:$0xff]
    %v1467 = vld [vmem:[#allocation11 + $0x10] sm:$0xff]
    %v1468 = vld [vmem:[#allocation11 + $0x18] sm:$0xff]
    %v1469 = vld [vmem:[#allocation11 + $0x20] sm:$0xff]
    %v1470 = vld [vmem:[#allocation11 + $0x28] sm:$0xff]
    %v1471 = vld [vmem:[#allocation11 + $0x30] sm:$0xff]
    %v1472 = vld [vmem:[#allocation11 + $0x38] sm:$0xff]
    %v1473 = vld [vmem:[#allocation11 + $0x40] sm:$0xff]
    %v1474 = vld [vmem:[#allocation11 + $0x48] sm:$0xff]
    %v1475 = vld [vmem:[#allocation11 + $0x50] sm:$0xff]
    %v1476 = vld [vmem:[#allocation11 + $0x58] sm:$0xff]
    %v1477 = vld [vmem:[#allocation11 + $0x60] sm:$0xff]
    %v1478 = vld [vmem:[#allocation11 + $0x68] sm:$0xff]
    %v1479 = vld [vmem:[#allocation11 + $0x70] sm:$0xff]
    %v1480 = vld [vmem:[#allocation11 + $0x78] sm:$0xff]
    %1481 = vmatprep.subr.mxu0 0.0
    %1482 = vmatpush1.msra.mxu0 %v1480
    %1483 = vmatprep.subr.mxu0 0.0
    %1484 = vmatpush1.msra.mxu0 %v1479
    %1485 = vmatprep.subr.mxu0 0.0
    %1486 = vmatpush1.msra.mxu0 %v1478
    %1487 = vmatprep.subr.mxu0 0.0
    %1488 = vmatpush1.msra.mxu0 %v1477
    %1489 = vmatprep.subr.mxu0 0.0
    %1490 = vmatpush1.msra.mxu0 %v1476
    %1491 = vmatprep.subr.mxu0 0.0
    %1492 = vmatpush1.msra.mxu0 %v1475
    %1493 = vmatprep.subr.mxu0 0.0
    %1494 = vmatpush1.msra.mxu0 %v1474
    %1495 = vmatprep.subr.mxu0 0.0
    %1496 = vmatpush1.msra.mxu0 %v1473
    %1497 = vmatprep.subr.mxu0 0.0
    %1498 = vmatpush1.msra.mxu0 %v1472
    %1499 = vmatprep.subr.mxu0 0.0
    %1500 = vmatpush1.msra.mxu0 %v1471
    %1501 = vmatprep.subr.mxu0 0.0
    %1502 = vmatpush1.msra.mxu0 %v1470
    %1503 = vmatprep.subr.mxu0 0.0
    %1504 = vmatpush1.msra.mxu0 %v1469
    %1505 = vmatprep.subr.mxu0 0.0
    %1506 = vmatpush1.msra.mxu0 %v1468
    %1507 = vmatprep.subr.mxu0 0.0
    %1508 = vmatpush1.msra.mxu0 %v1467
    %1509 = vmatprep.subr.mxu0 0.0
    %1510 = vmatpush1.msra.mxu0 %v1466
    %1511 = vmatprep.subr.mxu0 0.0
    %1512 = vmatpush1.msra.mxu0 %v1465
    %1513 = vmatprep.subr.mxu0 0.0
    %1514 = vmatpush2.msra.mxu0 0.0
    %1515 = vmatprep.subr.mxu0 0.0
    %1516 = vmatpush2.msra.mxu0 0.0
    %1517 = vmatprep.subr.mxu0 0.0
    %1518 = vmatpush2.msra.mxu0 0.0
    %1519 = vmatprep.subr.mxu0 0.0
    %1520 = vmatpush2.msra.mxu0 0.0
    %1521 = vmatprep.subr.mxu0 0.0
    %1522 = vmatpush2.msra.mxu0 0.0
    %1523 = vmatprep.subr.mxu0 0.0
    %1524 = vmatpush2.msra.mxu0 0.0
    %1525 = vmatprep.subr.mxu0 0.0
    %1526 = vmatpush2.msra.mxu0 0.0
    %1527 = vmatprep.subr.mxu0 0.0
    %1528 = vmatpush2.msra.mxu0 0.0
    %1529 = vmatprep.subr.mxu0 0.0
    %1530 = vmatpush2.msra.mxu0 0.0
    %1531 = vmatprep.subr.mxu0 0.0
    %1532 = vmatpush2.msra.mxu0 0.0
    %1533 = vmatprep.subr.mxu0 0.0
    %1534 = vmatpush2.msra.mxu0 0.0
    %1535 = vmatprep.subr.mxu0 0.0
    %1536 = vmatpush2.msra.mxu0 0.0
    %1537 = vmatprep.subr.mxu0 0.0
    %1538 = vmatpush2.msra.mxu0 0.0
    %1539 = vmatprep.subr.mxu0 0.0
    %1540 = vmatpush2.msra.mxu0 0.0
    %1541 = vmatprep.subr.mxu0 0.0
    %1542 = vmatpush2.msra.mxu0 0.0
    %1543 = vmatprep.subr.mxu0 0.0
    %1544 = vmatpush2.msra.mxu0 0.0
    %1545 = vmatprep.mubr.f32.mxu0 0.0
    %1546 = vmatmul.mubr.f32.gmra.mxu0 %v1460
    %v1547 = vpop.f32.mrf.mxu0
    %v1548 = vadd.f32 %v1464, %v1547
    %v1549 = vpop.f32.mrf.mxu0
    %1550 = vdwg.mxu0
    %1551 = vst [vmem:[#allocation2] sm:$0x1] %v1548
    %v1552 = vld [vmem:[#allocation3] sm:$0xff]
    %v1553 = vld [vmem:[#allocation10] sm:$0xff]
    %v1554 = vld [vmem:[#allocation10 + $0x8] sm:$0xff]
    %v1555 = vld [vmem:[#allocation10 + $0x10] sm:$0xff]
    %v1556 = vld [vmem:[#allocation10 + $0x18] sm:$0xff]
    %v1557 = vld [vmem:[#allocation10 + $0x20] sm:$0xff]
    %v1558 = vld [vmem:[#allocation10 + $0x28] sm:$0xff]
    %v1559 = vld [vmem:[#allocation10 + $0x30] sm:$0xff]
    %v1560 = vld [vmem:[#allocation10 + $0x38] sm:$0xff]
    %v1561 = vld [vmem:[#allocation10 + $0x40] sm:$0xff]
    %v1562 = vld [vmem:[#allocation10 + $0x48] sm:$0xff]
    %v1563 = vld [vmem:[#allocation10 + $0x50] sm:$0xff]
    %v1564 = vld [vmem:[#allocation10 + $0x58] sm:$0xff]
    %v1565 = vld [vmem:[#allocation10 + $0x60] sm:$0xff]
    %v1566 = vld [vmem:[#allocation10 + $0x68] sm:$0xff]
    %v1567 = vld [vmem:[#allocation10 + $0x70] sm:$0xff]
    %v1568 = vld [vmem:[#allocation10 + $0x78] sm:$0xff]
    %v1569 = vld [vmem:[#allocation10 + $0x80] sm:$0xff]
    %v1570 = vld [vmem:[#allocation10 + $0x88] sm:$0xff]
    %v1571 = vld [vmem:[#allocation10 + $0x90] sm:$0xff]
    %v1572 = vld [vmem:[#allocation10 + $0x98] sm:$0xff]
    %v1573 = vld [vmem:[#allocation10 + $0xa0] sm:$0xff]
    %v1574 = vld [vmem:[#allocation10 + $0xa8] sm:$0xff]
    %v1575 = vld [vmem:[#allocation10 + $0xb0] sm:$0xff]
    %v1576 = vld [vmem:[#allocation10 + $0xb8] sm:$0xff]
    %v1577 = vld [vmem:[#allocation10 + $0xc0] sm:$0xff]
    %v1578 = vld [vmem:[#allocation10 + $0xc8] sm:$0xff]
    %v1579 = vld [vmem:[#allocation10 + $0xd0] sm:$0xff]
    %v1580 = vld [vmem:[#allocation10 + $0xd8] sm:$0xff]
    %v1581 = vld [vmem:[#allocation10 + $0xe0] sm:$0xff]
    %v1582 = vld [vmem:[#allocation10 + $0xe8] sm:$0xff]
    %v1583 = vld [vmem:[#allocation10 + $0xf0] sm:$0xff]
    %v1584 = vld [vmem:[#allocation10 + $0xf8] sm:$0xff]
    %v1585 = vld [vmem:[#allocation10 + $0x100] sm:$0xff]
    %v1586 = vld [vmem:[#allocation10 + $0x108] sm:$0xff]
    %v1587 = vld [vmem:[#allocation10 + $0x110] sm:$0xff]
    %v1588 = vld [vmem:[#allocation10 + $0x118] sm:$0xff]
    %v1589 = vld [vmem:[#allocation10 + $0x120] sm:$0xff]
    %v1590 = vld [vmem:[#allocation10 + $0x128] sm:$0xff]
    %v1591 = vld [vmem:[#allocation10 + $0x130] sm:$0xff]
    %v1592 = vld [vmem:[#allocation10 + $0x138] sm:$0xff]
    %v1593 = vld [vmem:[#allocation10 + $0x140] sm:$0xff]
    %v1594 = vld [vmem:[#allocation10 + $0x148] sm:$0xff]
    %v1595 = vld [vmem:[#allocation10 + $0x150] sm:$0xff]
    %v1596 = vld [vmem:[#allocation10 + $0x158] sm:$0xff]
    %v1597 = vld [vmem:[#allocation10 + $0x160] sm:$0xff]
    %v1598 = vld [vmem:[#allocation10 + $0x168] sm:$0xff]
    %v1599 = vld [vmem:[#allocation10 + $0x170] sm:$0xff]
    %v1600 = vld [vmem:[#allocation10 + $0x178] sm:$0xff]
    %v1601 = vld [vmem:[#allocation4] sm:$0xff]
    %v1602 = vld [vmem:[#allocation4 + $0x8] sm:$0xff]
    %v1603 = vld [vmem:[#allocation4 + $0x10] sm:$0xff]
    %1604 = vmatprep.subr.mxu0 %v1599
    %1605 = vmatpush1.msra.mxu0 %v1598
    %1606 = vmatprep.subr.mxu0 %v1596
    %1607 = vmatpush1.msra.mxu0 %v1595
    %1608 = vmatprep.subr.mxu0 %v1593
    %1609 = vmatpush1.msra.mxu0 %v1592
    %1610 = vmatprep.subr.mxu0 %v1590
    %1611 = vmatpush1.msra.mxu0 %v1589
    %1612 = vmatprep.subr.mxu0 %v1587
    %1613 = vmatpush1.msra.mxu0 %v1586
    %1614 = vmatprep.subr.mxu0 %v1584
    %1615 = vmatpush1.msra.mxu0 %v1583
    %1616 = vmatprep.subr.mxu0 %v1581
    %1617 = vmatpush1.msra.mxu0 %v1580
    %1618 = vmatprep.subr.mxu0 %v1578
    %1619 = vmatpush1.msra.mxu0 %v1577
    %1620 = vmatprep.subr.mxu0 %v1575
    %1621 = vmatpush1.msra.mxu0 %v1574
    %1622 = vmatprep.subr.mxu0 %v1572
    %1623 = vmatpush1.msra.mxu0 %v1571
    %1624 = vmatprep.subr.mxu0 %v1569
    %1625 = vmatpush1.msra.mxu0 %v1568
    %1626 = vmatprep.subr.mxu0 %v1566
    %1627 = vmatpush1.msra.mxu0 %v1565
    %1628 = vmatprep.subr.mxu0 %v1563
    %1629 = vmatpush1.msra.mxu0 %v1562
    %1630 = vmatprep.subr.mxu0 %v1560
    %1631 = vmatpush1.msra.mxu0 %v1559
    %1632 = vmatprep.subr.mxu0 %v1557
    %1633 = vmatpush1.msra.mxu0 %v1556
    %1634 = vmatprep.subr.mxu0 %v1554
    %1635 = vmatpush1.msra.mxu0 %v1553
    %1636 = vmatprep.subr.mxu0 0.0
    %1637 = vmatpush2.msra.mxu0 0.0
    %1638 = vmatprep.subr.mxu0 0.0
    %1639 = vmatpush2.msra.mxu0 0.0
    %1640 = vmatprep.subr.mxu0 0.0
    %1641 = vmatpush2.msra.mxu0 0.0
    %1642 = vmatprep.subr.mxu0 0.0
    %1643 = vmatpush2.msra.mxu0 0.0
    %1644 = vmatprep.subr.mxu0 0.0
    %1645 = vmatpush2.msra.mxu0 0.0
    %1646 = vmatprep.subr.mxu0 0.0
    %1647 = vmatpush2.msra.mxu0 0.0
    %1648 = vmatprep.subr.mxu0 0.0
    %1649 = vmatpush2.msra.mxu0 0.0
    %1650 = vmatprep.subr.mxu0 0.0
    %1651 = vmatpush2.msra.mxu0 0.0
    %1652 = vmatprep.subr.mxu0 0.0
    %1653 = vmatpush2.msra.mxu0 0.0
    %1654 = vmatprep.subr.mxu0 0.0
    %1655 = vmatpush2.msra.mxu0 0.0
    %1656 = vmatprep.subr.mxu0 0.0
    %1657 = vmatpush2.msra.mxu0 0.0
    %1658 = vmatprep.subr.mxu0 0.0
    %1659 = vmatpush2.msra.mxu0 0.0
    %1660 = vmatprep.subr.mxu0 0.0
    %1661 = vmatpush2.msra.mxu0 0.0
    %1662 = vmatprep.subr.mxu0 0.0
    %1663 = vmatpush2.msra.mxu0 0.0
    %1664 = vmatprep.subr.mxu0 0.0
    %1665 = vmatpush2.msra.mxu0 0.0
    %1666 = vmatprep.subr.mxu0 0.0
    %1667 = vmatpush2.msra.mxu0 0.0
    %1668 = vmatprep.mubr.f32.mxu0 0.0
    %1669 = vmatmul.mubr.f32.gmra.mxu0 %v1552
    %v1670 = vpop.f32.mrf.mxu0
    %v1671 = vadd.f32 %v1601, %v1670
    %v1672 = vpop.f32.mrf.mxu0
    %v1673 = vadd.f32 %v1602, %v1672
    %1674 = vdwg.mxu0
    %1675 = vmatprep.subr.mxu0 0.0
    %1676 = vmatpush1.msra.mxu0 %v1600
    %1677 = vmatprep.subr.mxu0 0.0
    %1678 = vmatpush1.msra.mxu0 %v1597
    %1679 = vmatprep.subr.mxu0 0.0
    %1680 = vmatpush1.msra.mxu0 %v1594
    %1681 = vmatprep.subr.mxu0 0.0
    %1682 = vmatpush1.msra.mxu0 %v1591
    %1683 = vmatprep.subr.mxu0 0.0
    %1684 = vmatpush1.msra.mxu0 %v1588
    %1685 = vmatprep.subr.mxu0 0.0
    %1686 = vmatpush1.msra.mxu0 %v1585
    %1687 = vmatprep.subr.mxu0 0.0
    %1688 = vmatpush1.msra.mxu0 %v1582
    %1689 = vmatprep.subr.mxu0 0.0
    %1690 = vmatpush1.msra.mxu0 %v1579
    %1691 = vmatprep.subr.mxu0 0.0
    %1692 = vmatpush1.msra.mxu0 %v1576
    %1693 = vmatprep.subr.mxu0 0.0
    %1694 = vmatpush1.msra.mxu0 %v1573
    %1695 = vmatprep.subr.mxu0 0.0
    %1696 = vmatpush1.msra.mxu0 %v1570
    %1697 = vmatprep.subr.mxu0 0.0
    %1698 = vmatpush1.msra.mxu0 %v1567
    %1699 = vmatprep.subr.mxu0 0.0
    %1700 = vmatpush1.msra.mxu0 %v1564
    %1701 = vmatprep.subr.mxu0 0.0
    %1702 = vmatpush1.msra.mxu0 %v1561
    %1703 = vmatprep.subr.mxu0 0.0
    %1704 = vmatpush1.msra.mxu0 %v1558
    %1705 = vmatprep.subr.mxu0 0.0
    %1706 = vmatpush1.msra.mxu0 %v1555
    %1707 = vmatprep.subr.mxu0 0.0
    %1708 = vmatpush2.msra.mxu0 0.0
    %1709 = vmatprep.subr.mxu0 0.0
    %1710 = vmatpush2.msra.mxu0 0.0
    %1711 = vmatprep.subr.mxu0 0.0
    %1712 = vmatpush2.msra.mxu0 0.0
    %1713 = vmatprep.subr.mxu0 0.0
    %1714 = vmatpush2.msra.mxu0 0.0
    %1715 = vmatprep.subr.mxu0 0.0
    %1716 = vmatpush2.msra.mxu0 0.0
    %1717 = vmatprep.subr.mxu0 0.0
    %1718 = vmatpush2.msra.mxu0 0.0
    %1719 = vmatprep.subr.mxu0 0.0
    %1720 = vmatpush2.msra.mxu0 0.0
    %1721 = vmatprep.subr.mxu0 0.0
    %1722 = vmatpush2.msra.mxu0 0.0
    %1723 = vmatprep.subr.mxu0 0.0
    %1724 = vmatpush2.msra.mxu0 0.0
    %1725 = vmatprep.subr.mxu0 0.0
    %1726 = vmatpush2.msra.mxu0 0.0
    %1727 = vmatprep.subr.mxu0 0.0
    %1728 = vmatpush2.msra.mxu0 0.0
    %1729 = vmatprep.subr.mxu0 0.0
    %1730 = vmatpush2.msra.mxu0 0.0
    %1731 = vmatprep.subr.mxu0 0.0
    %1732 = vmatpush2.msra.mxu0 0.0
    %1733 = vmatprep.subr.mxu0 0.0
    %1734 = vmatpush2.msra.mxu0 0.0
    %1735 = vmatprep.subr.mxu0 0.0
    %1736 = vmatpush2.msra.mxu0 0.0
    %1737 = vmatprep.subr.mxu0 0.0
    %1738 = vmatpush2.msra.mxu0 0.0
    %1739 = vmatprep.mubr.f32.mxu0 0.0
    %1740 = vmatmul.mubr.f32.gmra.mxu0 %v1552
    %v1741 = vpop.f32.mrf.mxu0
    %v1742 = vadd.f32 %v1603, %v1741
    %v1743 = vpop.f32.mrf.mxu0
    %1744 = vdwg.mxu0
    %1745 = vst [vmem:[#allocation14] sm:$0xff] %v1671
    %1746 = vst [vmem:[#allocation14 + $0x8] sm:$0xff] %v1673
    %1747 = vst [vmem:[#allocation14 + $0x10] sm:$0xff] %v1742
    // Predicated region
    $region46: #{tpu_custom_call.1} parent=1 // pred_check
      _
    $region47: #{tpu_custom_call.1} parent=1 // pred_check_branch
      %1749 = sbr.rel (0) target = $region49
    $region48: #{tpu_custom_call.1} parent=1 // pred_region
      %s1751 = ssub.s32 384, 384
      %1752 = vsyncadd [#allocation7], %s1751
      %s1754 = sshll.u32 [#allocation14], 4
      %s1755 = int_to_ptr.vmem [resolvable:$true] %s1754
      %1757 = dma.vmem_to_hbm [thread:$0]  %s1755, 384, %s5, [#allocation7]
    $region49: #{tpu_custom_call.1} parent=1 // pred_fallthru
      _
    // Predicated region
    $region50: #{tpu_custom_call.1} parent=1 // pred_check
      _
    $region51: #{tpu_custom_call.1} parent=1 // pred_check_branch
      %1759 = sbr.rel (0) target = $region53
    $region52: #{tpu_custom_call.1} parent=1 // pred_region
      %1760 = dma.done [#allocation7], 384
    $region53: #{tpu_custom_call.1} parent=1 // pred_fallthru
      _
    %1761 = vsyncpa [#allocation6], 1
    %1762 = vsyncpa [#allocation9], 1
    %1763 = vsyncpa [#allocation12], 1
    %1764 = vsyncpa [#allocation7], 1

</llo_original>
